<compile_context>
chip_gen: v7x
topology: tpu7x:2x2x1
jax: 0.10.0
libtpu: 0.0.40
codegen_flags: <defaults>
</compile_context>

<pallas_src>
import functools

import jax
import jax.numpy as jnp
from jax import lax
from jax.experimental import pallas as pl
from jax.experimental.pallas import tpu as pltpu


def linear_attention_kernel(x_ref, wqkv_ref, wout_ref, bout_ref, g_ref, b_ref,
                            o_ref, *, heads, dim_head, eps):
    C, N = x_ref.shape[1], x_ref.shape[2]
    D = dim_head
    hidden = heads * D
    scale = float(D) ** -0.5

    # ---- to_qkv: one (3*hidden, C) x (C, N) matmul on the MXU (bf16 in, f32 acc) ----
    x = x_ref[0].astype(jnp.bfloat16)                      # (C, N)
    wqkv = wqkv_ref[...].astype(jnp.bfloat16)              # (3*hidden, C)
    qkv = jnp.dot(wqkv, x, preferred_element_type=jnp.float32)   # (3*hidden, N) f32

    head_outs = []
    for h in range(heads):                                  # heads is small (4); unrolled
        q = qkv[h * D:(h + 1) * D, :]                       # (D, N)
        k = qkv[hidden + h * D: hidden + (h + 1) * D, :]    # (D, N)
        v = qkv[2 * hidden + h * D: 2 * hidden + (h + 1) * D, :]  # (D, N)

        # q: softmax over d (sublane axis), then * scale
        q = q - jnp.max(q, axis=0, keepdims=True)
        q = jnp.exp(q)
        q = q * pl.reciprocal(jnp.sum(q, axis=0, keepdims=True), approx=True)
        q = q * scale

        # k: softmax over n (lane axis)
        k = k - jnp.max(k, axis=1, keepdims=True)
        k = jnp.exp(k)
        k = k * pl.reciprocal(jnp.sum(k, axis=1, keepdims=True), approx=True)

        # context^T[e, d] = sum_n v[e, n] * k[d, n]   (contract over N on the MXU)
        ctxT = lax.dot_general(
            v.astype(jnp.bfloat16), k.astype(jnp.bfloat16),
            dimension_numbers=(((1,), (1,)), ((), ())),
            preferred_element_type=jnp.float32)             # (D, D)

        # out[e, n] = sum_d context^T[e, d] * q[d, n]
        out_h = jnp.dot(ctxT.astype(jnp.bfloat16), q.astype(jnp.bfloat16),
                        preferred_element_type=jnp.float32)  # (D, N)
        head_outs.append(out_h)

    out_all = jnp.concatenate(head_outs, axis=0)            # (hidden, N) f32

    # ---- to_out (1x1 conv, f32) + LayerNorm over channels (rows), f32 ----
    y = jnp.dot(wout_ref[...], out_all,
                preferred_element_type=jnp.float32) + bout_ref[...]   # (C, N)
    mean = jnp.mean(y, axis=0, keepdims=True)               # (1, N)
    var = jnp.mean((y - mean) * (y - mean), axis=0, keepdims=True)
    y = (y - mean) * lax.rsqrt(var + eps) * g_ref[...] + b_ref[...]

    o_ref[...] = y.reshape(o_ref.shape).astype(o_ref.dtype)  # lane-dense (1, C, N) store


def linear_attention_forward(x_nchw, params, *, heads=4, dim_head=32, eps=1e-5):
    B, C, H, W = x_nchw.shape
    hidden = heads * dim_head
    N = H * W

    # Free reshapes only -- no transposes / pads, no extra HBM round-trips.
    x = x_nchw.reshape(B, C, N).astype(jnp.float32)
    w_qkv = params["w_qkv"].astype(jnp.float32)              # (3*hidden, C)
    w_out = params["w_out"].astype(jnp.float32)              # (C, hidden)
    b_out = params["b_out"].reshape(C, 1).astype(jnp.float32)
    g = params["g"].reshape(C, 1).astype(jnp.float32)
    b = params["b"].reshape(C, 1).astype(jnp.float32)

    kernel = functools.partial(linear_attention_kernel,
                               heads=heads, dim_head=dim_head, eps=eps)

    # Advisory cost estimate for XLA scheduling around the kernel.
    flops = 2 * B * N * (3 * hidden * C + 2 * heads * dim_head * dim_head
                         + hidden * C)
    transcendentals = 2 * B * hidden * N                     # softmax exps
    bytes_accessed = 4 * (2 * B * C * N + 3 * hidden * C + C * hidden + 3 * C)

    out = pl.pallas_call(
        kernel,
        out_shape=jax.ShapeDtypeStruct((B, C, N), jnp.float32),
        grid_spec=pltpu.PrefetchScalarGridSpec(
            num_scalar_prefetch=0,
            grid=(B,),
            in_specs=[
                pl.BlockSpec((1, C, N), lambda i: (i, 0, 0)),         # x
                pl.BlockSpec((3 * hidden, C), lambda i: (0, 0)),      # w_qkv
                pl.BlockSpec((C, hidden), lambda i: (0, 0)),          # w_out
                pl.BlockSpec((C, 1), lambda i: (0, 0)),               # b_out
                pl.BlockSpec((C, 1), lambda i: (0, 0)),               # ln gamma
                pl.BlockSpec((C, 1), lambda i: (0, 0)),               # ln beta
            ],
            out_specs=pl.BlockSpec((1, C, N), lambda i: (i, 0, 0)),
        ),
        compiler_params=pltpu.CompilerParams(
            dimension_semantics=("parallel",)),               # 2 TCs on v7x
        cost_estimate=pl.CostEstimate(
            flops=flops, transcendentals=transcendentals,
            bytes_accessed=bytes_accessed),
    )(x, w_qkv, w_out, b_out, g, b)

    return out.reshape(B, C, H, W)


def reference(x_nchw, params, heads=4, dim_head=32, eps=1e-5):
    """Pure-JAX (f32) reference matching the PyTorch LinearAttention module."""
    B, C, H, W = x_nchw.shape
    hidden = heads * dim_head
    scale = float(dim_head) ** -0.5
    N = H * W

    xf = x_nchw.reshape(B, C, N).astype(jnp.float32)
    qkv = jnp.einsum("oc,bcn->bon", params["w_qkv"], xf)      # (B, 3*hidden, N)
    q, k, v = (qkv[:, :hidden], qkv[:, hidden:2 * hidden], qkv[:, 2 * hidden:])
    split = lambda t: t.reshape(B, heads, dim_head, N)
    q, k, v = split(q), split(k), split(v)

    q = jax.nn.softmax(q, axis=-2) * scale
    k = jax.nn.softmax(k, axis=-1)
    context = jnp.einsum("bhdn,bhen->bhde", k, v)
    out = jnp.einsum("bhde,bhdn->bhen", context, q)           # (B, heads, D, N)
    out = out.reshape(B, hidden, N)

    y = jnp.einsum("oc,bcn->bon", params["w_out"], out) + params["b_out"].reshape(1, -1, 1)
    mean = y.mean(axis=1, keepdims=True)
    var = ((y - mean) ** 2).mean(axis=1, keepdims=True)
    y = (y - mean) / jnp.sqrt(var + eps) * params["g"].reshape(1, -1, 1) \
        + params["b"].reshape(1, -1, 1)
    return y.reshape(B, C, H, W)


if __name__ == "__main__":
    B, dim, H, W = 2, 32, 16, 16
    heads, dim_head = 4, 32
    hidden = heads * dim_head

    key = jax.random.PRNGKey(0)
    k0, k1, k2, k3 = jax.random.split(key, 4)

    params = {
        "w_qkv": jax.random.normal(k0, (3 * hidden, dim), jnp.float32) * 0.1,
        "w_out": jax.random.normal(k1, (dim, hidden), jnp.float32) * 0.1,
        "b_out": jax.random.normal(k2, (dim,), jnp.float32) * 0.1,
        "g": jnp.ones((dim,), jnp.float32),      # LayerNorm affine init
        "b": jnp.zeros((dim,), jnp.float32),
    }
    x = jax.random.normal(k3, (B, dim, H, W), jnp.float32)

    out = linear_attention_forward(x, params, heads=heads, dim_head=dim_head)
    out = jax.block_until_ready(out)
    assert out.shape == (B, dim, H, W)

    ref = reference(x, params, heads=heads, dim_head=dim_head)
    max_err = float(jnp.max(jnp.abs(out - ref)))
    # bf16 MXU inputs (f32 accumulation) -> small tolerance vs the f32 reference.
    assert max_err < 2e-2, f"mismatch vs reference: {max_err}"

    print("KERNEL_OK")
</pallas_src>

<mosaic_0001>
module attributes {stable_mosaic.version = 11 : i64} {
  func.func @linear_attention_kernel(%arg0: i32, %arg1: memref<1x32x256xf32, #tpu.memory_space<vmem>>, %arg2: memref<384x32xf32, #tpu.memory_space<vmem>>, %arg3: memref<32x128xf32, #tpu.memory_space<vmem>>, %arg4: memref<32x1xf32, #tpu.memory_space<vmem>>, %arg5: memref<32x1xf32, #tpu.memory_space<vmem>>, %arg6: memref<32x1xf32, #tpu.memory_space<vmem>>, %arg7: memref<1x32x256xf32, #tpu.memory_space<vmem>>) attributes {dimension_semantics = [#tpu.dimension_semantics<parallel>], iteration_bounds = array<i64: 2>, scalar_prefetch = 0 : i64, scratch_operands = 0 : i64, tpu.core_type = #tpu.core_type<tc>, window_params = [{transform_indices = @transform_0, window_bounds = array<i64: 1, 32, 256>}, {pipeline_mode = #tpu.pipeline_mode<synchronous>, transform_indices = @transform_1, window_bounds = array<i64: 384, 32>}, {pipeline_mode = #tpu.pipeline_mode<synchronous>, transform_indices = @transform_2, window_bounds = array<i64: 32, 128>}, {pipeline_mode = #tpu.pipeline_mode<synchronous>, transform_indices = @transform_3, window_bounds = array<i64: 32, 1>}, {pipeline_mode = #tpu.pipeline_mode<synchronous>, transform_indices = @transform_4, window_bounds = array<i64: 32, 1>}, {pipeline_mode = #tpu.pipeline_mode<synchronous>, transform_indices = @transform_5, window_bounds = array<i64: 32, 1>}, {transform_indices = @transform_6, window_bounds = array<i64: 1, 32, 256>}]} {
    %c0 = arith.constant 0 : index
    %c0_0 = arith.constant 0 : index
    %c0_1 = arith.constant 0 : index
    %0 = vector.load %arg1[%c0, %c0_0, %c0_1] : memref<1x32x256xf32, #tpu.memory_space<vmem>>, vector<1x32x256xf32>
    %1 = vector.shape_cast %0 : vector<1x32x256xf32> to vector<32x256xf32>
    %2 = arith.truncf %1 : vector<32x256xf32> to vector<32x256xbf16>
    %c0_2 = arith.constant 0 : index
    %c0_3 = arith.constant 0 : index
    %3 = vector.load %arg2[%c0_2, %c0_3] : memref<384x32xf32, #tpu.memory_space<vmem>>, vector<384x32xf32>
    %4 = arith.truncf %3 : vector<384x32xf32> to vector<384x32xbf16>
    %cst = arith.constant dense<0.000000e+00> : vector<384x256xf32>
    %5 = tpu.matmul %4, %2, %cst {dimension_numbers = #tpu.dot_dimension_numbers<[1], [0], [0], [1], [0, 0, 1, 1], [], []>} : vector<384x32xbf16>, vector<32x256xbf16>, vector<384x256xf32> -> vector<384x256xf32>
    %6 = vector.extract_strided_slice %5 {offsets = [0, 0], sizes = [32, 256], strides = [1, 1]} : vector<384x256xf32> to vector<32x256xf32>
    %7 = vector.extract_strided_slice %5 {offsets = [128, 0], sizes = [32, 256], strides = [1, 1]} : vector<384x256xf32> to vector<32x256xf32>
    %8 = vector.extract_strided_slice %5 {offsets = [256, 0], sizes = [32, 256], strides = [1, 1]} : vector<384x256xf32> to vector<32x256xf32>
    %cst_4 = arith.constant dense<0xFF800000> : vector<256xf32>
    %9 = vector.multi_reduction <maximumf>, %6, %cst_4 [0] : vector<32x256xf32> to vector<256xf32>
    %10 = vector.shape_cast %9 : vector<256xf32> to vector<1x256xf32>
    %11 = vector.broadcast %10 : vector<1x256xf32> to vector<32x256xf32>
    %12 = arith.subf %6, %11 : vector<32x256xf32>
    %13 = math.exp %12 : vector<32x256xf32>
    %cst_5 = arith.constant dense<0.000000e+00> : vector<256xf32>
    %14 = vector.multi_reduction <add>, %13, %cst_5 [0] : vector<32x256xf32> to vector<256xf32>
    %15 = vector.shape_cast %14 : vector<256xf32> to vector<1x256xf32>
    %16 = tpu.reciprocal %15 {approx = true} : vector<1x256xf32> -> vector<1x256xf32>
    %17 = vector.broadcast %16 : vector<1x256xf32> to vector<32x256xf32>
    %18 = arith.mulf %13, %17 : vector<32x256xf32>
    %cst_6 = arith.constant 0.176776692 : f32
    %19 = vector.broadcast %cst_6 : f32 to vector<32x256xf32>
    %20 = arith.mulf %18, %19 : vector<32x256xf32>
    %cst_7 = arith.constant dense<0xFF800000> : vector<32xf32>
    %21 = vector.multi_reduction <maximumf>, %7, %cst_7 [1] : vector<32x256xf32> to vector<32xf32>
    %22 = vector.shape_cast %21 : vector<32xf32> to vector<32x1xf32>
    %23 = vector.broadcast %22 : vector<32x1xf32> to vector<32x256xf32>
    %24 = arith.subf %7, %23 : vector<32x256xf32>
    %25 = math.exp %24 : vector<32x256xf32>
    %cst_8 = arith.constant dense<0.000000e+00> : vector<32xf32>
    %26 = vector.multi_reduction <add>, %25, %cst_8 [1] : vector<32x256xf32> to vector<32xf32>
    %27 = vector.shape_cast %26 : vector<32xf32> to vector<32x1xf32>
    %28 = tpu.reciprocal %27 {approx = true} : vector<32x1xf32> -> vector<32x1xf32>
    %29 = vector.broadcast %28 : vector<32x1xf32> to vector<32x256xf32>
    %30 = arith.mulf %25, %29 : vector<32x256xf32>
    %31 = arith.truncf %8 : vector<32x256xf32> to vector<32x256xbf16>
    %32 = arith.truncf %30 : vector<32x256xf32> to vector<32x256xbf16>
    %cst_9 = arith.constant dense<0.000000e+00> : vector<32x32xf32>
    %33 = tpu.matmul %31, %32, %cst_9 {dimension_numbers = #tpu.dot_dimension_numbers<[1], [1], [0], [0], [0, 0, 1, 0], [], []>} : vector<32x256xbf16>, vector<32x256xbf16>, vector<32x32xf32> -> vector<32x32xf32>
    %34 = arith.truncf %33 : vector<32x32xf32> to vector<32x32xbf16>
    %35 = arith.truncf %20 : vector<32x256xf32> to vector<32x256xbf16>
    %cst_10 = arith.constant dense<0.000000e+00> : vector<32x256xf32>
    %36 = tpu.matmul %34, %35, %cst_10 {dimension_numbers = #tpu.dot_dimension_numbers<[1], [0], [0], [1], [0, 0, 1, 1], [], []>} : vector<32x32xbf16>, vector<32x256xbf16>, vector<32x256xf32> -> vector<32x256xf32>
    %37 = vector.extract_strided_slice %5 {offsets = [32, 0], sizes = [32, 256], strides = [1, 1]} : vector<384x256xf32> to vector<32x256xf32>
    %38 = vector.extract_strided_slice %5 {offsets = [160, 0], sizes = [32, 256], strides = [1, 1]} : vector<384x256xf32> to vector<32x256xf32>
    %39 = vector.extract_strided_slice %5 {offsets = [288, 0], sizes = [32, 256], strides = [1, 1]} : vector<384x256xf32> to vector<32x256xf32>
    %cst_11 = arith.constant dense<0xFF800000> : vector<256xf32>
    %40 = vector.multi_reduction <maximumf>, %37, %cst_11 [0] : vector<32x256xf32> to vector<256xf32>
    %41 = vector.shape_cast %40 : vector<256xf32> to vector<1x256xf32>
    %42 = vector.broadcast %41 : vector<1x256xf32> to vector<32x256xf32>
    %43 = arith.subf %37, %42 : vector<32x256xf32>
    %44 = math.exp %43 : vector<32x256xf32>
    %cst_12 = arith.constant dense<0.000000e+00> : vector<256xf32>
    %45 = vector.multi_reduction <add>, %44, %cst_12 [0] : vector<32x256xf32> to vector<256xf32>
    %46 = vector.shape_cast %45 : vector<256xf32> to vector<1x256xf32>
    %47 = tpu.reciprocal %46 {approx = true} : vector<1x256xf32> -> vector<1x256xf32>
    %48 = vector.broadcast %47 : vector<1x256xf32> to vector<32x256xf32>
    %49 = arith.mulf %44, %48 : vector<32x256xf32>
    %cst_13 = arith.constant 0.176776692 : f32
    %50 = vector.broadcast %cst_13 : f32 to vector<32x256xf32>
    %51 = arith.mulf %49, %50 : vector<32x256xf32>
    %cst_14 = arith.constant dense<0xFF800000> : vector<32xf32>
    %52 = vector.multi_reduction <maximumf>, %38, %cst_14 [1] : vector<32x256xf32> to vector<32xf32>
    %53 = vector.shape_cast %52 : vector<32xf32> to vector<32x1xf32>
    %54 = vector.broadcast %53 : vector<32x1xf32> to vector<32x256xf32>
    %55 = arith.subf %38, %54 : vector<32x256xf32>
    %56 = math.exp %55 : vector<32x256xf32>
    %cst_15 = arith.constant dense<0.000000e+00> : vector<32xf32>
    %57 = vector.multi_reduction <add>, %56, %cst_15 [1] : vector<32x256xf32> to vector<32xf32>
    %58 = vector.shape_cast %57 : vector<32xf32> to vector<32x1xf32>
    %59 = tpu.reciprocal %58 {approx = true} : vector<32x1xf32> -> vector<32x1xf32>
    %60 = vector.broadcast %59 : vector<32x1xf32> to vector<32x256xf32>
    %61 = arith.mulf %56, %60 : vector<32x256xf32>
    %62 = arith.truncf %39 : vector<32x256xf32> to vector<32x256xbf16>
    %63 = arith.truncf %61 : vector<32x256xf32> to vector<32x256xbf16>
    %cst_16 = arith.constant dense<0.000000e+00> : vector<32x32xf32>
    %64 = tpu.matmul %62, %63, %cst_16 {dimension_numbers = #tpu.dot_dimension_numbers<[1], [1], [0], [0], [0, 0, 1, 0], [], []>} : vector<32x256xbf16>, vector<32x256xbf16>, vector<32x32xf32> -> vector<32x32xf32>
    %65 = arith.truncf %64 : vector<32x32xf32> to vector<32x32xbf16>
    %66 = arith.truncf %51 : vector<32x256xf32> to vector<32x256xbf16>
    %cst_17 = arith.constant dense<0.000000e+00> : vector<32x256xf32>
    %67 = tpu.matmul %65, %66, %cst_17 {dimension_numbers = #tpu.dot_dimension_numbers<[1], [0], [0], [1], [0, 0, 1, 1], [], []>} : vector<32x32xbf16>, vector<32x256xbf16>, vector<32x256xf32> -> vector<32x256xf32>
    %68 = vector.extract_strided_slice %5 {offsets = [64, 0], sizes = [32, 256], strides = [1, 1]} : vector<384x256xf32> to vector<32x256xf32>
    %69 = vector.extract_strided_slice %5 {offsets = [192, 0], sizes = [32, 256], strides = [1, 1]} : vector<384x256xf32> to vector<32x256xf32>
    %70 = vector.extract_strided_slice %5 {offsets = [320, 0], sizes = [32, 256], strides = [1, 1]} : vector<384x256xf32> to vector<32x256xf32>
    %cst_18 = arith.constant dense<0xFF800000> : vector<256xf32>
    %71 = vector.multi_reduction <maximumf>, %68, %cst_18 [0] : vector<32x256xf32> to vector<256xf32>
    %72 = vector.shape_cast %71 : vector<256xf32> to vector<1x256xf32>
    %73 = vector.broadcast %72 : vector<1x256xf32> to vector<32x256xf32>
    %74 = arith.subf %68, %73 : vector<32x256xf32>
    %75 = math.exp %74 : vector<32x256xf32>
    %cst_19 = arith.constant dense<0.000000e+00> : vector<256xf32>
    %76 = vector.multi_reduction <add>, %75, %cst_19 [0] : vector<32x256xf32> to vector<256xf32>
    %77 = vector.shape_cast %76 : vector<256xf32> to vector<1x256xf32>
    %78 = tpu.reciprocal %77 {approx = true} : vector<1x256xf32> -> vector<1x256xf32>
    %79 = vector.broadcast %78 : vector<1x256xf32> to vector<32x256xf32>
    %80 = arith.mulf %75, %79 : vector<32x256xf32>
    %cst_20 = arith.constant 0.176776692 : f32
    %81 = vector.broadcast %cst_20 : f32 to vector<32x256xf32>
    %82 = arith.mulf %80, %81 : vector<32x256xf32>
    %cst_21 = arith.constant dense<0xFF800000> : vector<32xf32>
    %83 = vector.multi_reduction <maximumf>, %69, %cst_21 [1] : vector<32x256xf32> to vector<32xf32>
    %84 = vector.shape_cast %83 : vector<32xf32> to vector<32x1xf32>
    %85 = vector.broadcast %84 : vector<32x1xf32> to vector<32x256xf32>
    %86 = arith.subf %69, %85 : vector<32x256xf32>
    %87 = math.exp %86 : vector<32x256xf32>
    %cst_22 = arith.constant dense<0.000000e+00> : vector<32xf32>
    %88 = vector.multi_reduction <add>, %87, %cst_22 [1] : vector<32x256xf32> to vector<32xf32>
    %89 = vector.shape_cast %88 : vector<32xf32> to vector<32x1xf32>
    %90 = tpu.reciprocal %89 {approx = true} : vector<32x1xf32> -> vector<32x1xf32>
    %91 = vector.broadcast %90 : vector<32x1xf32> to vector<32x256xf32>
    %92 = arith.mulf %87, %91 : vector<32x256xf32>
    %93 = arith.truncf %70 : vector<32x256xf32> to vector<32x256xbf16>
    %94 = arith.truncf %92 : vector<32x256xf32> to vector<32x256xbf16>
    %cst_23 = arith.constant dense<0.000000e+00> : vector<32x32xf32>
    %95 = tpu.matmul %93, %94, %cst_23 {dimension_numbers = #tpu.dot_dimension_numbers<[1], [1], [0], [0], [0, 0, 1, 0], [], []>} : vector<32x256xbf16>, vector<32x256xbf16>, vector<32x32xf32> -> vector<32x32xf32>
    %96 = arith.truncf %95 : vector<32x32xf32> to vector<32x32xbf16>
    %97 = arith.truncf %82 : vector<32x256xf32> to vector<32x256xbf16>
    %cst_24 = arith.constant dense<0.000000e+00> : vector<32x256xf32>
    %98 = tpu.matmul %96, %97, %cst_24 {dimension_numbers = #tpu.dot_dimension_numbers<[1], [0], [0], [1], [0, 0, 1, 1], [], []>} : vector<32x32xbf16>, vector<32x256xbf16>, vector<32x256xf32> -> vector<32x256xf32>
    %99 = vector.extract_strided_slice %5 {offsets = [96, 0], sizes = [32, 256], strides = [1, 1]} : vector<384x256xf32> to vector<32x256xf32>
    %100 = vector.extract_strided_slice %5 {offsets = [224, 0], sizes = [32, 256], strides = [1, 1]} : vector<384x256xf32> to vector<32x256xf32>
    %101 = vector.extract_strided_slice %5 {offsets = [352, 0], sizes = [32, 256], strides = [1, 1]} : vector<384x256xf32> to vector<32x256xf32>
    %cst_25 = arith.constant dense<0xFF800000> : vector<256xf32>
    %102 = vector.multi_reduction <maximumf>, %99, %cst_25 [0] : vector<32x256xf32> to vector<256xf32>
    %103 = vector.shape_cast %102 : vector<256xf32> to vector<1x256xf32>
    %104 = vector.broadcast %103 : vector<1x256xf32> to vector<32x256xf32>
    %105 = arith.subf %99, %104 : vector<32x256xf32>
    %106 = math.exp %105 : vector<32x256xf32>
    %cst_26 = arith.constant dense<0.000000e+00> : vector<256xf32>
    %107 = vector.multi_reduction <add>, %106, %cst_26 [0] : vector<32x256xf32> to vector<256xf32>
    %108 = vector.shape_cast %107 : vector<256xf32> to vector<1x256xf32>
    %109 = tpu.reciprocal %108 {approx = true} : vector<1x256xf32> -> vector<1x256xf32>
    %110 = vector.broadcast %109 : vector<1x256xf32> to vector<32x256xf32>
    %111 = arith.mulf %106, %110 : vector<32x256xf32>
    %cst_27 = arith.constant 0.176776692 : f32
    %112 = vector.broadcast %cst_27 : f32 to vector<32x256xf32>
    %113 = arith.mulf %111, %112 : vector<32x256xf32>
    %cst_28 = arith.constant dense<0xFF800000> : vector<32xf32>
    %114 = vector.multi_reduction <maximumf>, %100, %cst_28 [1] : vector<32x256xf32> to vector<32xf32>
    %115 = vector.shape_cast %114 : vector<32xf32> to vector<32x1xf32>
    %116 = vector.broadcast %115 : vector<32x1xf32> to vector<32x256xf32>
    %117 = arith.subf %100, %116 : vector<32x256xf32>
    %118 = math.exp %117 : vector<32x256xf32>
    %cst_29 = arith.constant dense<0.000000e+00> : vector<32xf32>
    %119 = vector.multi_reduction <add>, %118, %cst_29 [1] : vector<32x256xf32> to vector<32xf32>
    %120 = vector.shape_cast %119 : vector<32xf32> to vector<32x1xf32>
    %121 = tpu.reciprocal %120 {approx = true} : vector<32x1xf32> -> vector<32x1xf32>
    %122 = vector.broadcast %121 : vector<32x1xf32> to vector<32x256xf32>
    %123 = arith.mulf %118, %122 : vector<32x256xf32>
    %124 = arith.truncf %101 : vector<32x256xf32> to vector<32x256xbf16>
    %125 = arith.truncf %123 : vector<32x256xf32> to vector<32x256xbf16>
    %cst_30 = arith.constant dense<0.000000e+00> : vector<32x32xf32>
    %126 = tpu.matmul %124, %125, %cst_30 {dimension_numbers = #tpu.dot_dimension_numbers<[1], [1], [0], [0], [0, 0, 1, 0], [], []>} : vector<32x256xbf16>, vector<32x256xbf16>, vector<32x32xf32> -> vector<32x32xf32>
    %127 = arith.truncf %126 : vector<32x32xf32> to vector<32x32xbf16>
    %128 = arith.truncf %113 : vector<32x256xf32> to vector<32x256xbf16>
    %cst_31 = arith.constant dense<0.000000e+00> : vector<32x256xf32>
    %129 = tpu.matmul %127, %128, %cst_31 {dimension_numbers = #tpu.dot_dimension_numbers<[1], [0], [0], [1], [0, 0, 1, 1], [], []>} : vector<32x32xbf16>, vector<32x256xbf16>, vector<32x256xf32> -> vector<32x256xf32>
    %130 = tpu.concatenate %36, %67, %98, %129 in 0 : vector<32x256xf32>, vector<32x256xf32>, vector<32x256xf32>, vector<32x256xf32> -> vector<128x256xf32>
    %c0_32 = arith.constant 0 : index
    %c0_33 = arith.constant 0 : index
    %131 = vector.load %arg3[%c0_32, %c0_33] : memref<32x128xf32, #tpu.memory_space<vmem>>, vector<32x128xf32>
    %cst_34 = arith.constant dense<0.000000e+00> : vector<32x256xf32>
    %132 = tpu.matmul %131, %130, %cst_34 {dimension_numbers = #tpu.dot_dimension_numbers<[1], [0], [0], [1], [0, 0, 1, 1], [], []>} : vector<32x128xf32>, vector<128x256xf32>, vector<32x256xf32> -> vector<32x256xf32>
    %c0_35 = arith.constant 0 : index
    %c0_36 = arith.constant 0 : index
    %133 = vector.load %arg4[%c0_35, %c0_36] : memref<32x1xf32, #tpu.memory_space<vmem>>, vector<32x1xf32>
    %134 = vector.broadcast %133 : vector<32x1xf32> to vector<32x256xf32>
    %135 = arith.addf %132, %134 : vector<32x256xf32>
    %cst_37 = arith.constant dense<0.000000e+00> : vector<256xf32>
    %136 = vector.multi_reduction <add>, %135, %cst_37 [0] : vector<32x256xf32> to vector<256xf32>
    %137 = vector.shape_cast %136 : vector<256xf32> to vector<1x256xf32>
    %cst_38 = arith.constant 3.200000e+01 : f32
    %138 = vector.broadcast %cst_38 : f32 to vector<1x256xf32>
    %139 = arith.divf %137, %138 : vector<1x256xf32>
    %140 = vector.broadcast %139 : vector<1x256xf32> to vector<32x256xf32>
    %141 = arith.subf %135, %140 : vector<32x256xf32>
    %142 = vector.broadcast %139 : vector<1x256xf32> to vector<32x256xf32>
    %143 = arith.subf %135, %142 : vector<32x256xf32>
    %144 = arith.mulf %141, %143 : vector<32x256xf32>
    %cst_39 = arith.constant dense<0.000000e+00> : vector<256xf32>
    %145 = vector.multi_reduction <add>, %144, %cst_39 [0] : vector<32x256xf32> to vector<256xf32>
    %146 = vector.shape_cast %145 : vector<256xf32> to vector<1x256xf32>
    %cst_40 = arith.constant 3.200000e+01 : f32
    %147 = vector.broadcast %cst_40 : f32 to vector<1x256xf32>
    %148 = arith.divf %146, %147 : vector<1x256xf32>
    %149 = vector.broadcast %139 : vector<1x256xf32> to vector<32x256xf32>
    %150 = arith.subf %135, %149 : vector<32x256xf32>
    %cst_41 = arith.constant 9.99999974E-6 : f32
    %151 = vector.broadcast %cst_41 : f32 to vector<1x256xf32>
    %152 = arith.addf %148, %151 : vector<1x256xf32>
    %153 = math.rsqrt %152 : vector<1x256xf32>
    %154 = vector.broadcast %153 : vector<1x256xf32> to vector<32x256xf32>
    %155 = arith.mulf %150, %154 : vector<32x256xf32>
    %c0_42 = arith.constant 0 : index
    %c0_43 = arith.constant 0 : index
    %156 = vector.load %arg5[%c0_42, %c0_43] : memref<32x1xf32, #tpu.memory_space<vmem>>, vector<32x1xf32>
    %157 = vector.broadcast %156 : vector<32x1xf32> to vector<32x256xf32>
    %158 = arith.mulf %155, %157 : vector<32x256xf32>
    %c0_44 = arith.constant 0 : index
    %c0_45 = arith.constant 0 : index
    %159 = vector.load %arg6[%c0_44, %c0_45] : memref<32x1xf32, #tpu.memory_space<vmem>>, vector<32x1xf32>
    %160 = vector.broadcast %159 : vector<32x1xf32> to vector<32x256xf32>
    %161 = arith.addf %158, %160 : vector<32x256xf32>
    %162 = vector.shape_cast %161 : vector<32x256xf32> to vector<1x32x256xf32>
    %c0_46 = arith.constant 0 : index
    %c0_47 = arith.constant 0 : index
    %c0_48 = arith.constant 0 : index
    %163 = vector.load %arg7[%c0_46, %c0_47, %c0_48] : memref<1x32x256xf32, #tpu.memory_space<vmem>>, vector<1x32x256xf32>
    tpu.vector_store %arg7[%c0_46, %c0_47, %c0_48], %162 {strides = array<i32>} : memref<1x32x256xf32, #tpu.memory_space<vmem>>, vector<1x32x256xf32>,
    return
  }
  func.func @transform_0(%arg0: i32) -> (i32, i32, i32) {
    %c0_i32 = arith.constant 0 : i32
    %c0_i32_0 = arith.constant 0 : i32
    %c0_i32_1 = arith.constant 0 : i32
    return %arg0, %c0_i32, %c0_i32_0 : i32, i32, i32
  }
  func.func @transform_1(%arg0: i32) -> (i32, i32) {
    %c0_i32 = arith.constant 0 : i32
    %c0_i32_0 = arith.constant 0 : i32
    %c0_i32_1 = arith.constant 0 : i32
    return %c0_i32, %c0_i32_0 : i32, i32
  }
  func.func @transform_2(%arg0: i32) -> (i32, i32) {
    %c0_i32 = arith.constant 0 : i32
    %c0_i32_0 = arith.constant 0 : i32
    %c0_i32_1 = arith.constant 0 : i32
    return %c0_i32, %c0_i32_0 : i32, i32
  }
  func.func @transform_3(%arg0: i32) -> (i32, i32) {
    %c0_i32 = arith.constant 0 : i32
    %c0_i32_0 = arith.constant 0 : i32
    %c0_i32_1 = arith.constant 0 : i32
    return %c0_i32, %c0_i32_0 : i32, i32
  }
  func.func @transform_4(%arg0: i32) -> (i32, i32) {
    %c0_i32 = arith.constant 0 : i32
    %c0_i32_0 = arith.constant 0 : i32
    %c0_i32_1 = arith.constant 0 : i32
    return %c0_i32, %c0_i32_0 : i32, i32
  }
  func.func @transform_5(%arg0: i32) -> (i32, i32) {
    %c0_i32 = arith.constant 0 : i32
    %c0_i32_0 = arith.constant 0 : i32
    %c0_i32_1 = arith.constant 0 : i32
    return %c0_i32, %c0_i32_0 : i32, i32
  }
  func.func @transform_6(%arg0: i32) -> (i32, i32, i32) {
    %c0_i32 = arith.constant 0 : i32
    %c0_i32_0 = arith.constant 0 : i32
    %c0_i32_1 = arith.constant 0 : i32
    return %arg0, %c0_i32, %c0_i32_0 : i32, i32, i32
  }
}

</mosaic_0001>

<llo_original>
// kernel: tpu_custom_call.1
$region0: #{tpu_custom_call.1}
  #allocation0 [shape = 'u32[]', space=smem, size = 0x4, offset = 0x4, fixed_abs, tag = 'smem constant byte address 0x4 - core index']
  #allocation1 [shape = 'u32[144,128]{1,0:T(1,128)}', space=vmem, size = 0x12000, scoped, tag = 'internal scratch']
  %s0 = inlined_call_operand.vmem [shape: f32[2,32,256], index: 0, kind: input, shape index: {}]
  %s1 = inlined_call_operand.vmem [shape: f32[384,32], index: 1, kind: input, shape index: {}]
  %s2 = inlined_call_operand.vmem [shape: f32[32,128], index: 2, kind: input, shape index: {}]
  %s3 = inlined_call_operand.vmem [shape: f32[32,1], index: 3, kind: input, shape index: {}]
  %s4 = inlined_call_operand.vmem [shape: f32[32,1], index: 4, kind: input, shape index: {}]
  %s5 = inlined_call_operand.vmem [shape: f32[32,1], index: 5, kind: input, shape index: {}]
  %s6 = inlined_call_operand.hbm [shape: f32[2,32,256], index: 6, kind: output, shape index: {}]
  %s7 = sld [smem:[#allocation0]]
  $region57: #{tpu_custom_call.1} parent=0
    _
  %s9 = ssub.s32 1, %s7
  %s10 = scalar_select 0, %s9, %s7
  $region1: #{tpu_custom_call.1} parent=0
    #allocation2 [shape = 'u8[65536]{0}', space=vmem, size = 0x10000, scoped, tag = 'output window, operand 0']
    #allocation3 [shape = 's32[2]{0}', space=sflag, size = 0x8, scoped, tag = 'scoped memory for tpu_custom_call.1']
    %11 = vsyncpa [#allocation3], 0
    %s12 = scalar_lea.sflag [#allocation3], 1
    %13 = vsyncpa %s12, 0
    loop: start=0, step=1, limit=4
    $region2: #{tpu_custom_call.1} parent=1 // loop_pre_header
      _
    $region3: #{tpu_custom_call.1} parent=1 // loop_header
      %s15 = sphi 0, %s19
      %p16 = scmp.ge.s32.totalorder %s15, 4
      %s25 = sphi 0, %s27
      %s28 = sphi 0, %s25
      %s29 = sphi 0, %s28
      %s45 = sphi 0, %s29
      %s49 = sphi 0, %s49
      %s51 = sphi 0, %s49
      %s52 = sphi 0, %s51
      %s66 = sphi 0, %s52
      %s70 = sphi 0, %s70
      %s72 = sphi 0, %s70
      %s73 = sphi 0, %s72
      %s87 = sphi 0, %s73
      %s91 = sphi 0, %s91
      %s93 = sphi 0, %s91
      %s94 = sphi 0, %s93
      %s108 = sphi 0, %s94
      %s112 = sphi 0, %s112
      %s114 = sphi 0, %s112
      %s115 = sphi 0, %s114
      %s129 = sphi 0, %s115
      %s133 = sphi 0, %s133
      %s135 = sphi 0, %s133
      %s136 = sphi 0, %s135
      %s150 = sphi 0, %s136
      %s156 = sphi 0, %s158
      %s159 = sphi 0, %s156
      %s160 = sphi 0, %s159
      %s176 = sphi 0, %s160
    $region4: #{tpu_custom_call.1} parent=1 // loop_header_branch
      %18 = sbr.rel (%p16) target = $region8
    $region5: #{tpu_custom_call.1} parent=1 // loop_body
      %s20 = ssub.s32 %s15, 1
      %s21 = ssub.s32 %s15, 2
      %s22 = sadd.s32 %s15, 1
      %s23 = ssub.s32 %s15, %s22
      %p24 = scmp.eq.s32.totalorder %s23, 0
      %s26 = sadd.s32 %s25, 1
      %s27 = scalar_select %p24, %s25, %s26
      %p30 = pneg %p24
      %p31 = scmp.eq.s32.totalorder %s15, 1
      %p32 = por %p30, %p31
      %p33 = scmp.ne.s32.totalorder %s25, %s28
      %p34 = scmp.eq.s32.totalorder %s15, 0
      %p35 = por %p33, %p34
      %p36 = scmp.ne.s32.totalorder %s25, %s28
      %p37 = scmp.eq.s32.totalorder %s20, 1
      %p38 = por %p36, %p37
      %p39 = scmp.ne.s32.totalorder %s28, %s29
      %p40 = scmp.eq.s32.totalorder %s20, 0
      %p41 = por %p39, %p40
      %p42 = scmp.ne.s32.totalorder %s28, %s29
      %p43 = scmp.eq.s32.totalorder %s21, 1
      %p44 = por %p42, %p43
      %p46 = scmp.ne.s32.totalorder %s29, %s45
      %p47 = scmp.eq.s32.totalorder %s21, 0
      %p48 = por %p46, %p47
      %s50 = sadd.s32 %s49, 1
      %p53 = scmp.eq.s32.totalorder %s15, 1
      %p54 = scmp.ne.s32.totalorder %s49, %s51
      %p55 = scmp.eq.s32.totalorder %s15, 0
      %p56 = por %p54, %p55
      %p57 = scmp.ne.s32.totalorder %s49, %s51
      %p58 = scmp.eq.s32.totalorder %s20, 1
      %p59 = por %p57, %p58
      %p60 = scmp.ne.s32.totalorder %s51, %s52
      %p61 = scmp.eq.s32.totalorder %s20, 0
      %p62 = por %p60, %p61
      %p63 = scmp.ne.s32.totalorder %s51, %s52
      %p64 = scmp.eq.s32.totalorder %s21, 1
      %p65 = por %p63, %p64
      %p67 = scmp.ne.s32.totalorder %s52, %s66
      %p68 = scmp.eq.s32.totalorder %s21, 0
      %p69 = por %p67, %p68
      %s71 = sadd.s32 %s70, 1
      %p74 = scmp.eq.s32.totalorder %s15, 1
      %p75 = scmp.ne.s32.totalorder %s70, %s72
      %p76 = scmp.eq.s32.totalorder %s15, 0
      %p77 = por %p75, %p76
      %p78 = scmp.ne.s32.totalorder %s70, %s72
      %p79 = scmp.eq.s32.totalorder %s20, 1
      %p80 = por %p78, %p79
      %p81 = scmp.ne.s32.totalorder %s72, %s73
      %p82 = scmp.eq.s32.totalorder %s20, 0
      %p83 = por %p81, %p82
      %p84 = scmp.ne.s32.totalorder %s72, %s73
      %p85 = scmp.eq.s32.totalorder %s21, 1
      %p86 = por %p84, %p85
      %p88 = scmp.ne.s32.totalorder %s73, %s87
      %p89 = scmp.eq.s32.totalorder %s21, 0
      %p90 = por %p88, %p89
      %s92 = sadd.s32 %s91, 1
      %p95 = scmp.eq.s32.totalorder %s15, 1
      %p96 = scmp.ne.s32.totalorder %s91, %s93
      %p97 = scmp.eq.s32.totalorder %s15, 0
      %p98 = por %p96, %p97
      %p99 = scmp.ne.s32.totalorder %s91, %s93
      %p100 = scmp.eq.s32.totalorder %s20, 1
      %p101 = por %p99, %p100
      %p102 = scmp.ne.s32.totalorder %s93, %s94
      %p103 = scmp.eq.s32.totalorder %s20, 0
      %p104 = por %p102, %p103
      %p105 = scmp.ne.s32.totalorder %s93, %s94
      %p106 = scmp.eq.s32.totalorder %s21, 1
      %p107 = por %p105, %p106
      %p109 = scmp.ne.s32.totalorder %s94, %s108
      %p110 = scmp.eq.s32.totalorder %s21, 0
      %p111 = por %p109, %p110
      %s113 = sadd.s32 %s112, 1
      %p116 = scmp.eq.s32.totalorder %s15, 1
      %p117 = scmp.ne.s32.totalorder %s112, %s114
      %p118 = scmp.eq.s32.totalorder %s15, 0
      %p119 = por %p117, %p118
      %p120 = scmp.ne.s32.totalorder %s112, %s114
      %p121 = scmp.eq.s32.totalorder %s20, 1
      %p122 = por %p120, %p121
      %p123 = scmp.ne.s32.totalorder %s114, %s115
      %p124 = scmp.eq.s32.totalorder %s20, 0
      %p125 = por %p123, %p124
      %p126 = scmp.ne.s32.totalorder %s114, %s115
      %p127 = scmp.eq.s32.totalorder %s21, 1
      %p128 = por %p126, %p127
      %p130 = scmp.ne.s32.totalorder %s115, %s129
      %p131 = scmp.eq.s32.totalorder %s21, 0
      %p132 = por %p130, %p131
      %s134 = sadd.s32 %s133, 1
      %p137 = scmp.eq.s32.totalorder %s15, 1
      %p138 = scmp.ne.s32.totalorder %s133, %s135
      %p139 = scmp.eq.s32.totalorder %s15, 0
      %p140 = por %p138, %p139
      %p141 = scmp.ne.s32.totalorder %s133, %s135
      %p142 = scmp.eq.s32.totalorder %s20, 1
      %p143 = por %p141, %p142
      %p144 = scmp.ne.s32.totalorder %s135, %s136
      %p145 = scmp.eq.s32.totalorder %s20, 0
      %p146 = por %p144, %p145
      %p147 = scmp.ne.s32.totalorder %s135, %s136
      %p148 = scmp.eq.s32.totalorder %s21, 1
      %p149 = por %p147, %p148
      %p151 = scmp.ne.s32.totalorder %s136, %s150
      %p152 = scmp.eq.s32.totalorder %s21, 0
      %p153 = por %p151, %p152
      %s154 = ssub.s32 %s15, %s22
      %p155 = scmp.eq.s32.totalorder %s154, 0
      %s157 = sadd.s32 %s156, 1
      %s158 = scalar_select %p155, %s156, %s157
      %p161 = pneg %p155
      %p162 = scmp.eq.s32.totalorder %s15, 1
      %p163 = por %p161, %p162
      %p164 = scmp.ne.s32.totalorder %s156, %s159
      %p165 = scmp.eq.s32.totalorder %s15, 0
      %p166 = por %p164, %p165
      %p167 = scmp.ne.s32.totalorder %s156, %s159
      %p168 = scmp.eq.s32.totalorder %s20, 1
      %p169 = por %p167, %p168
      %p170 = scmp.ne.s32.totalorder %s159, %s160
      %p171 = scmp.eq.s32.totalorder %s20, 0
      %p172 = por %p170, %p171
      %p173 = scmp.ne.s32.totalorder %s159, %s160
      %p174 = scmp.eq.s32.totalorder %s21, 1
      %p175 = por %p173, %p174
      %p177 = scmp.ne.s32.totalorder %s160, %s176
      %p178 = scmp.eq.s32.totalorder %s21, 0
      %p179 = por %p177, %p178
      %p180 = scmp.le.s32.totalorder 1, %s15
      %p181 = scmp.lt.s32.totalorder %s15, 3
      %p182 = pnand %p180, %p181
      %p183 = pneg %p182
      // Predicated region
      $region9: #{tpu_custom_call.1} parent=5 // pred_check
        _
      $region10: #{tpu_custom_call.1} parent=5 // pred_check_branch
        %185 = sbr.rel (%p182) target = $region12
      $region11: #{tpu_custom_call.1} parent=5 // pred_region
        %s186 = ssub.s32 %s15, 1
        // Predicated region
        $region13: #{tpu_custom_call.1} parent=11 // pred_check
          %p187 = pneg %p62
        $region14: #{tpu_custom_call.1} parent=11 // pred_check_branch
          %189 = sbr.rel (%p187) target = $region16
        $region15: #{tpu_custom_call.1} parent=11 // pred_region
          _
        $region16: #{tpu_custom_call.1} parent=11 // pred_fallthru
          _
        // Predicated region
        $region17: #{tpu_custom_call.1} parent=11 // pred_check
          %p190 = pneg %p83
        $region18: #{tpu_custom_call.1} parent=11 // pred_check_branch
          %192 = sbr.rel (%p190) target = $region20
        $region19: #{tpu_custom_call.1} parent=11 // pred_region
          _
        $region20: #{tpu_custom_call.1} parent=11 // pred_fallthru
          _
        // Predicated region
        $region21: #{tpu_custom_call.1} parent=11 // pred_check
          %p193 = pneg %p104
        $region22: #{tpu_custom_call.1} parent=11 // pred_check_branch
          %195 = sbr.rel (%p193) target = $region24
        $region23: #{tpu_custom_call.1} parent=11 // pred_region
          _
        $region24: #{tpu_custom_call.1} parent=11 // pred_fallthru
          _
        // Predicated region
        $region25: #{tpu_custom_call.1} parent=11 // pred_check
          %p196 = pneg %p125
        $region26: #{tpu_custom_call.1} parent=11 // pred_check_branch
          %198 = sbr.rel (%p196) target = $region28
        $region27: #{tpu_custom_call.1} parent=11 // pred_region
          _
        $region28: #{tpu_custom_call.1} parent=11 // pred_fallthru
          _
        // Predicated region
        $region29: #{tpu_custom_call.1} parent=11 // pred_check
          %p199 = pneg %p146
        $region30: #{tpu_custom_call.1} parent=11 // pred_check_branch
          %201 = sbr.rel (%p199) target = $region32
        $region31: #{tpu_custom_call.1} parent=11 // pred_region
          _
        $region32: #{tpu_custom_call.1} parent=11 // pred_fallthru
          _
      $region12: #{tpu_custom_call.1} parent=5 // pred_fallthru
        _
      %p202 = scmp.lt.s32.totalorder %s15, 2
      // Predicated region
      $region33: #{tpu_custom_call.1} parent=5 // pred_check
        %p203 = pneg %p202
      $region34: #{tpu_custom_call.1} parent=5 // pred_check_branch
        %205 = sbr.rel (%p203) target = $region36
      $region35: #{tpu_custom_call.1} parent=5 // pred_region
        // Predicated region
        $region37: #{tpu_custom_call.1} parent=35 // pred_check
          %p206 = pneg %p35
        $region38: #{tpu_custom_call.1} parent=35 // pred_check_branch
          %208 = sbr.rel (%p206) target = $region40
        $region39: #{tpu_custom_call.1} parent=35 // pred_region
          %p209 = scmp.lt.s32.totalorder %s15, 1
          %s210 = scalar_select %p209, %s15, 1
          %s211 = smul.addr %s210, 8
          %s212 = smul.addr %s211, 8
          %s213 = scalar_lea.vmem %s0, %s212
        $region40: #{tpu_custom_call.1} parent=35 // pred_fallthru
          _
      $region36: #{tpu_custom_call.1} parent=5 // pred_fallthru
        _
      %p214 = scmp.le.s32.totalorder 1, %s15
      %p215 = scmp.lt.s32.totalorder %s15, 3
      %p216 = pnand %p214, %p215
      %p217 = pneg %p216
      // Predicated region
      $region41: #{tpu_custom_call.1} parent=5 // pred_check
        _
      $region42: #{tpu_custom_call.1} parent=5 // pred_check_branch
        %219 = sbr.rel (%p216) target = $region44
      $region43: #{tpu_custom_call.1} parent=5 // pred_region
        %s220 = ssub.s32 %s15, 1
        %p221 = scmp.lt.s32.totalorder %s20, 1
        %s222 = scalar_select %p221, %s20, 1
        %s223 = smul.addr %s222, 8
        %s224 = smul.addr %s223, 8
        %s225 = scalar_lea.vmem %s0, %s224
        %p226 = pneg %p41
        %p227 = pneg %p38
        %p228 = pneg %p62
        %p229 = pneg %p59
        %p230 = pneg %p83
        %p231 = pneg %p80
        %p232 = pneg %p104
        %p233 = pneg %p101
        %p234 = pneg %p125
        %p235 = pneg %p122
        %p236 = pneg %p146
        %p237 = pneg %p143
        %p238 = pneg %p172
        %p239 = pneg %p169
        %s240 = sand.u32 %s159, 1
        %s241 = scalar_lea.sflag [#allocation3], %s240
        %s242 = sand.u32 %s159, 1
        %s243 = smul.addr %s242, 64
        %s244 = scalar_lea.vmem [#allocation2], %s243
        %p245 = scmp.lt.s32.totalorder %s20, 1
        %s246 = scalar_select %p245, %s20, 1
        %s247 = smul.addr %s246, 8
        %s248 = smul.addr %s247, 8
        %s249 = scalar_lea.vmem %s0, %s248
        %v251 = vld [vmem:[%s249] sm:$0xff]
        %v252 = vld [vmem:[%s249 + $0x8] sm:$0xff]
        %v253 = vld [vmem:[%s249 + $0x10] sm:$0xff]
        %v254 = vld [vmem:[%s249 + $0x18] sm:$0xff]
        %v255 = vld [vmem:[%s249 + $0x20] sm:$0xff]
        %v256 = vld [vmem:[%s249 + $0x28] sm:$0xff]
        %v257 = vld [vmem:[%s249 + $0x30] sm:$0xff]
        %v258 = vld [vmem:[%s249 + $0x38] sm:$0xff]
        %v259 = vpack.c.bf16 %v253, %v251
        %v260 = vpack.c.bf16 %v254, %v252
        %v261 = vpack.c.bf16 %v257, %v255
        %v262 = vpack.c.bf16 %v258, %v256
        %v263 = vld [vmem:[%s1] sm:$0xff]
        %v264 = vld [vmem:[%s1 + $0x8] sm:$0xff]
        %v265 = vld [vmem:[%s1 + $0x10] sm:$0xff]
        %v266 = vld [vmem:[%s1 + $0x18] sm:$0xff]
        %v267 = vld [vmem:[%s1 + $0x20] sm:$0xff]
        %v268 = vld [vmem:[%s1 + $0x28] sm:$0xff]
        %v269 = vld [vmem:[%s1 + $0x30] sm:$0xff]
        %v270 = vld [vmem:[%s1 + $0x38] sm:$0xff]
        %v271 = vld [vmem:[%s1 + $0x40] sm:$0xff]
        %v272 = vld [vmem:[%s1 + $0x48] sm:$0xff]
        %v273 = vld [vmem:[%s1 + $0x50] sm:$0xff]
        %v274 = vld [vmem:[%s1 + $0x58] sm:$0xff]
        %v275 = vld [vmem:[%s1 + $0x60] sm:$0xff]
        %v276 = vld [vmem:[%s1 + $0x68] sm:$0xff]
        %v277 = vld [vmem:[%s1 + $0x70] sm:$0xff]
        %v278 = vld [vmem:[%s1 + $0x78] sm:$0xff]
        %v279 = vld [vmem:[%s1 + $0x80] sm:$0xff]
        %v280 = vld [vmem:[%s1 + $0x88] sm:$0xff]
        %v281 = vld [vmem:[%s1 + $0x90] sm:$0xff]
        %v282 = vld [vmem:[%s1 + $0x98] sm:$0xff]
        %v283 = vld [vmem:[%s1 + $0xa0] sm:$0xff]
        %v284 = vld [vmem:[%s1 + $0xa8] sm:$0xff]
        %v285 = vld [vmem:[%s1 + $0xb0] sm:$0xff]
        %v286 = vld [vmem:[%s1 + $0xb8] sm:$0xff]
        %v287 = vld [vmem:[%s1 + $0xc0] sm:$0xff]
        %v288 = vld [vmem:[%s1 + $0xc8] sm:$0xff]
        %v289 = vld [vmem:[%s1 + $0xd0] sm:$0xff]
        %v290 = vld [vmem:[%s1 + $0xd8] sm:$0xff]
        %v291 = vld [vmem:[%s1 + $0xe0] sm:$0xff]
        %v292 = vld [vmem:[%s1 + $0xe8] sm:$0xff]
        %v293 = vld [vmem:[%s1 + $0xf0] sm:$0xff]
        %v294 = vld [vmem:[%s1 + $0xf8] sm:$0xff]
        %v295 = vld [vmem:[%s1 + $0x100] sm:$0xff]
        %v296 = vld [vmem:[%s1 + $0x108] sm:$0xff]
        %v297 = vld [vmem:[%s1 + $0x110] sm:$0xff]
        %v298 = vld [vmem:[%s1 + $0x118] sm:$0xff]
        %v299 = vld [vmem:[%s1 + $0x120] sm:$0xff]
        %v300 = vld [vmem:[%s1 + $0x128] sm:$0xff]
        %v301 = vld [vmem:[%s1 + $0x130] sm:$0xff]
        %v302 = vld [vmem:[%s1 + $0x138] sm:$0xff]
        %v303 = vld [vmem:[%s1 + $0x140] sm:$0xff]
        %v304 = vld [vmem:[%s1 + $0x148] sm:$0xff]
        %v305 = vld [vmem:[%s1 + $0x150] sm:$0xff]
        %v306 = vld [vmem:[%s1 + $0x158] sm:$0xff]
        %v307 = vld [vmem:[%s1 + $0x160] sm:$0xff]
        %v308 = vld [vmem:[%s1 + $0x168] sm:$0xff]
        %v309 = vld [vmem:[%s1 + $0x170] sm:$0xff]
        %v310 = vld [vmem:[%s1 + $0x178] sm:$0xff]
        %v311 = vpack.c.bf16 %v264, %v263
        %v312 = vpack.c.bf16 %v266, %v265
        %v313 = vpack.c.bf16 %v268, %v267
        %v314 = vpack.c.bf16 %v270, %v269
        %v315 = vpack.c.bf16 %v272, %v271
        %v316 = vpack.c.bf16 %v274, %v273
        %v317 = vpack.c.bf16 %v276, %v275
        %v318 = vpack.c.bf16 %v278, %v277
        %v319 = vpack.c.bf16 %v280, %v279
        %v320 = vpack.c.bf16 %v282, %v281
        %v321 = vpack.c.bf16 %v284, %v283
        %v322 = vpack.c.bf16 %v286, %v285
        %v323 = vpack.c.bf16 %v288, %v287
        %v324 = vpack.c.bf16 %v290, %v289
        %v325 = vpack.c.bf16 %v292, %v291
        %v326 = vpack.c.bf16 %v294, %v293
        %v327 = vpack.c.bf16 %v296, %v295
        %v328 = vpack.c.bf16 %v298, %v297
        %v329 = vpack.c.bf16 %v300, %v299
        %v330 = vpack.c.bf16 %v302, %v301
        %v331 = vpack.c.bf16 %v304, %v303
        %v332 = vpack.c.bf16 %v306, %v305
        %v333 = vpack.c.bf16 %v308, %v307
        %v334 = vpack.c.bf16 %v310, %v309
        %vm335 = vcmask 261120
        %v337 = vsel %vm335, %v311, 0
        %v340 = vsel %vm335, %v312, 0
        %v343 = vsel %vm335, %v313, 0
        %v346 = vsel %vm335, %v314, 0
        %v349 = vsel %vm335, %v315, 0
        %v352 = vsel %vm335, %v316, 0
        %v355 = vsel %vm335, %v317, 0
        %v358 = vsel %vm335, %v318, 0
        %v361 = vsel %vm335, %v319, 0
        %v364 = vsel %vm335, %v320, 0
        %v367 = vsel %vm335, %v321, 0
        %v370 = vsel %vm335, %v322, 0
        %v373 = vsel %vm335, %v323, 0
        %v376 = vsel %vm335, %v324, 0
        %v379 = vsel %vm335, %v325, 0
        %v382 = vsel %vm335, %v326, 0
        %v385 = vsel %vm335, %v327, 0
        %v388 = vsel %vm335, %v328, 0
        %v391 = vsel %vm335, %v329, 0
        %v394 = vsel %vm335, %v330, 0
        %v397 = vsel %vm335, %v331, 0
        %v400 = vsel %vm335, %v332, 0
        %v403 = vsel %vm335, %v333, 0
        %v406 = vsel %vm335, %v334, 0
        %408 = vmatprep.subr.bf16.mxu0 %v260
        %409 = vmatpush1.bf16.msra.mxu0 %v259
        %410 = vmatprep.subr.bf16.mxu0 %v262
        %411 = vmatpush1.bf16.msra.mxu0 %v261
        %412 = vmatprep.subr.bf16.mxu0 0
        %413 = vmatpush1.bf16.msra.mxu0 0
        %414 = vmatprep.subr.bf16.mxu0 0
        %415 = vmatpush1.bf16.msra.mxu0 0
        %416 = vmatprep.subr.bf16.mxu0 0
        %417 = vmatpush1.bf16.msra.mxu0 0
        %418 = vmatprep.subr.bf16.mxu0 0
        %419 = vmatpush1.bf16.msra.mxu0 0
        %420 = vmatprep.subr.bf16.mxu0 0
        %421 = vmatpush1.bf16.msra.mxu0 0
        %422 = vmatprep.subr.bf16.mxu0 0
        %423 = vmatpush1.bf16.msra.mxu0 0
        %424 = vmatprep.subr.bf16.mxu0 0
        %425 = vmatpush1.bf16.msra.mxu0 0
        %426 = vmatprep.subr.bf16.mxu0 0
        %427 = vmatpush1.bf16.msra.mxu0 0
        %428 = vmatprep.subr.bf16.mxu0 0
        %429 = vmatpush1.bf16.msra.mxu0 0
        %430 = vmatprep.subr.bf16.mxu0 0
        %431 = vmatpush1.bf16.msra.mxu0 0
        %432 = vmatprep.subr.bf16.mxu0 0
        %433 = vmatpush1.bf16.msra.mxu0 0
        %434 = vmatprep.subr.bf16.mxu0 0
        %435 = vmatpush1.bf16.msra.mxu0 0
        %436 = vmatprep.subr.bf16.mxu0 0
        %437 = vmatpush1.bf16.msra.mxu0 0
        %438 = vmatprep.subr.bf16.mxu0 0
        %439 = vmatpush1.bf16.msra.mxu0 0
        %440 = vmatprep.mubr.bf16.mxu0 0
        %441 = vmatmul.mubr.bf16.gmra.mrb[0].mxu0 %v337
        %v442 = vpop.f32.mrb[0].mxu0
        %v443 = vadd.f32 0.0, %v442
        %v444 = vpop.f32.mrb[0].mxu0
        %v445 = vadd.f32 0.0, %v444
        %v446 = vpop.f32.mrb[0].mxu0
        %v447 = vadd.f32 0.0, %v446
        %v448 = vpop.f32.mrb[0].mxu0
        %v449 = vadd.f32 0.0, %v448
        %450 = vmatprep.mubr.bf16.mxu0 0
        %451 = vmatmul.mubr.bf16.gmra.mrb[0].mxu0 %v340
        %v452 = vpop.f32.mrb[0].mxu0
        %v453 = vadd.f32 0.0, %v452
        %v454 = vpop.f32.mrb[0].mxu0
        %v455 = vadd.f32 0.0, %v454
        %v456 = vpop.f32.mrb[0].mxu0
        %v457 = vadd.f32 0.0, %v456
        %v458 = vpop.f32.mrb[0].mxu0
        %v459 = vadd.f32 0.0, %v458
        %460 = vmatprep.mubr.bf16.mxu0 0
        %461 = vmatmul.mubr.bf16.gmra.mrb[0].mxu0 %v343
        %v462 = vpop.f32.mrb[0].mxu0
        %v463 = vadd.f32 0.0, %v462
        %v464 = vpop.f32.mrb[0].mxu0
        %v465 = vadd.f32 0.0, %v464
        %v466 = vpop.f32.mrb[0].mxu0
        %v467 = vadd.f32 0.0, %v466
        %v468 = vpop.f32.mrb[0].mxu0
        %v469 = vadd.f32 0.0, %v468
        %470 = vmatprep.mubr.bf16.mxu0 0
        %471 = vmatmul.mubr.bf16.gmra.mrb[0].mxu0 %v346
        %v472 = vpop.f32.mrb[0].mxu0
        %v473 = vadd.f32 0.0, %v472
        %v474 = vpop.f32.mrb[0].mxu0
        %v475 = vadd.f32 0.0, %v474
        %v476 = vpop.f32.mrb[0].mxu0
        %v477 = vadd.f32 0.0, %v476
        %v478 = vpop.f32.mrb[0].mxu0
        %v479 = vadd.f32 0.0, %v478
        %480 = vmatprep.mubr.bf16.mxu0 0
        %481 = vmatmul.mubr.bf16.gmra.mrb[0].mxu0 %v349
        %v482 = vpop.f32.mrb[0].mxu0
        %v483 = vadd.f32 0.0, %v482
        %v484 = vpop.f32.mrb[0].mxu0
        %v485 = vadd.f32 0.0, %v484
        %v486 = vpop.f32.mrb[0].mxu0
        %v487 = vadd.f32 0.0, %v486
        %v488 = vpop.f32.mrb[0].mxu0
        %v489 = vadd.f32 0.0, %v488
        %490 = vmatprep.mubr.bf16.mxu0 0
        %491 = vmatmul.mubr.bf16.gmra.mrb[0].mxu0 %v352
        %v492 = vpop.f32.mrb[0].mxu0
        %v493 = vadd.f32 0.0, %v492
        %v494 = vpop.f32.mrb[0].mxu0
        %v495 = vadd.f32 0.0, %v494
        %v496 = vpop.f32.mrb[0].mxu0
        %v497 = vadd.f32 0.0, %v496
        %v498 = vpop.f32.mrb[0].mxu0
        %v499 = vadd.f32 0.0, %v498
        %500 = vmatprep.mubr.bf16.mxu0 0
        %501 = vmatmul.mubr.bf16.gmra.mrb[0].mxu0 %v355
        %v502 = vpop.f32.mrb[0].mxu0
        %v503 = vadd.f32 0.0, %v502
        %v504 = vpop.f32.mrb[0].mxu0
        %v505 = vadd.f32 0.0, %v504
        %v506 = vpop.f32.mrb[0].mxu0
        %v507 = vadd.f32 0.0, %v506
        %v508 = vpop.f32.mrb[0].mxu0
        %v509 = vadd.f32 0.0, %v508
        %510 = vmatprep.mubr.bf16.mxu0 0
        %511 = vmatmul.mubr.bf16.gmra.mrb[0].mxu0 %v358
        %v512 = vpop.f32.mrb[0].mxu0
        %v513 = vadd.f32 0.0, %v512
        %v514 = vpop.f32.mrb[0].mxu0
        %v515 = vadd.f32 0.0, %v514
        %v516 = vpop.f32.mrb[0].mxu0
        %v517 = vadd.f32 0.0, %v516
        %v518 = vpop.f32.mrb[0].mxu0
        %v519 = vadd.f32 0.0, %v518
        %520 = vmatprep.mubr.bf16.mxu0 0
        %521 = vmatmul.mubr.bf16.gmra.mrb[0].mxu0 %v361
        %v522 = vpop.f32.mrb[0].mxu0
        %v523 = vadd.f32 0.0, %v522
        %v524 = vpop.f32.mrb[0].mxu0
        %v525 = vadd.f32 0.0, %v524
        %v526 = vpop.f32.mrb[0].mxu0
        %v527 = vadd.f32 0.0, %v526
        %v528 = vpop.f32.mrb[0].mxu0
        %v529 = vadd.f32 0.0, %v528
        %530 = vmatprep.mubr.bf16.mxu0 0
        %531 = vmatmul.mubr.bf16.gmra.mrb[0].mxu0 %v364
        %v532 = vpop.f32.mrb[0].mxu0
        %v533 = vadd.f32 0.0, %v532
        %v534 = vpop.f32.mrb[0].mxu0
        %v535 = vadd.f32 0.0, %v534
        %v536 = vpop.f32.mrb[0].mxu0
        %v537 = vadd.f32 0.0, %v536
        %v538 = vpop.f32.mrb[0].mxu0
        %v539 = vadd.f32 0.0, %v538
        %540 = vmatprep.mubr.bf16.mxu0 0
        %541 = vmatmul.mubr.bf16.gmra.mrb[0].mxu0 %v367
        %v542 = vpop.f32.mrb[0].mxu0
        %v543 = vadd.f32 0.0, %v542
        %v544 = vpop.f32.mrb[0].mxu0
        %v545 = vadd.f32 0.0, %v544
        %v546 = vpop.f32.mrb[0].mxu0
        %v547 = vadd.f32 0.0, %v546
        %v548 = vpop.f32.mrb[0].mxu0
        %v549 = vadd.f32 0.0, %v548
        %550 = vmatprep.mubr.bf16.mxu0 0
        %551 = vmatmul.mubr.bf16.gmra.mrb[0].mxu0 %v370
        %v552 = vpop.f32.mrb[0].mxu0
        %v553 = vadd.f32 0.0, %v552
        %v554 = vpop.f32.mrb[0].mxu0
        %v555 = vadd.f32 0.0, %v554
        %v556 = vpop.f32.mrb[0].mxu0
        %v557 = vadd.f32 0.0, %v556
        %v558 = vpop.f32.mrb[0].mxu0
        %v559 = vadd.f32 0.0, %v558
        %560 = vmatprep.mubr.bf16.mxu0 0
        %561 = vmatmul.mubr.bf16.gmra.mrb[0].mxu0 %v373
        %v562 = vpop.f32.mrb[0].mxu0
        %v563 = vadd.f32 0.0, %v562
        %v564 = vpop.f32.mrb[0].mxu0
        %v565 = vadd.f32 0.0, %v564
        %v566 = vpop.f32.mrb[0].mxu0
        %v567 = vadd.f32 0.0, %v566
        %v568 = vpop.f32.mrb[0].mxu0
        %v569 = vadd.f32 0.0, %v568
        %570 = vmatprep.mubr.bf16.mxu0 0
        %571 = vmatmul.mubr.bf16.gmra.mrb[0].mxu0 %v376
        %v572 = vpop.f32.mrb[0].mxu0
        %v573 = vadd.f32 0.0, %v572
        %v574 = vpop.f32.mrb[0].mxu0
        %v575 = vadd.f32 0.0, %v574
        %v576 = vpop.f32.mrb[0].mxu0
        %v577 = vadd.f32 0.0, %v576
        %v578 = vpop.f32.mrb[0].mxu0
        %v579 = vadd.f32 0.0, %v578
        %580 = vmatprep.mubr.bf16.mxu0 0
        %581 = vmatmul.mubr.bf16.gmra.mrb[0].mxu0 %v379
        %v582 = vpop.f32.mrb[0].mxu0
        %v583 = vadd.f32 0.0, %v582
        %v584 = vpop.f32.mrb[0].mxu0
        %v585 = vadd.f32 0.0, %v584
        %v586 = vpop.f32.mrb[0].mxu0
        %v587 = vadd.f32 0.0, %v586
        %v588 = vpop.f32.mrb[0].mxu0
        %v589 = vadd.f32 0.0, %v588
        %590 = vmatprep.mubr.bf16.mxu0 0
        %591 = vmatmul.mubr.bf16.gmra.mrb[0].mxu0 %v382
        %v592 = vpop.f32.mrb[0].mxu0
        %v593 = vadd.f32 0.0, %v592
        %v594 = vpop.f32.mrb[0].mxu0
        %v595 = vadd.f32 0.0, %v594
        %v596 = vpop.f32.mrb[0].mxu0
        %v597 = vadd.f32 0.0, %v596
        %v598 = vpop.f32.mrb[0].mxu0
        %v599 = vadd.f32 0.0, %v598
        %600 = vmatprep.mubr.bf16.mxu0 0
        %601 = vmatmul.mubr.bf16.gmra.mrb[0].mxu0 %v385
        %v602 = vpop.f32.mrb[0].mxu0
        %v603 = vadd.f32 0.0, %v602
        %v604 = vpop.f32.mrb[0].mxu0
        %v605 = vadd.f32 0.0, %v604
        %v606 = vpop.f32.mrb[0].mxu0
        %v607 = vadd.f32 0.0, %v606
        %v608 = vpop.f32.mrb[0].mxu0
        %v609 = vadd.f32 0.0, %v608
        %610 = vmatprep.mubr.bf16.mxu0 0
        %611 = vmatmul.mubr.bf16.gmra.mrb[0].mxu0 %v388
        %v612 = vpop.f32.mrb[0].mxu0
        %v613 = vadd.f32 0.0, %v612
        %v614 = vpop.f32.mrb[0].mxu0
        %v615 = vadd.f32 0.0, %v614
        %v616 = vpop.f32.mrb[0].mxu0
        %v617 = vadd.f32 0.0, %v616
        %v618 = vpop.f32.mrb[0].mxu0
        %v619 = vadd.f32 0.0, %v618
        %620 = vmatprep.mubr.bf16.mxu0 0
        %621 = vmatmul.mubr.bf16.gmra.mrb[0].mxu0 %v391
        %v622 = vpop.f32.mrb[0].mxu0
        %v623 = vadd.f32 0.0, %v622
        %v624 = vpop.f32.mrb[0].mxu0
        %v625 = vadd.f32 0.0, %v624
        %v626 = vpop.f32.mrb[0].mxu0
        %v627 = vadd.f32 0.0, %v626
        %v628 = vpop.f32.mrb[0].mxu0
        %v629 = vadd.f32 0.0, %v628
        %630 = vmatprep.mubr.bf16.mxu0 0
        %631 = vmatmul.mubr.bf16.gmra.mrb[0].mxu0 %v394
        %v632 = vpop.f32.mrb[0].mxu0
        %v633 = vadd.f32 0.0, %v632
        %v634 = vpop.f32.mrb[0].mxu0
        %v635 = vadd.f32 0.0, %v634
        %v636 = vpop.f32.mrb[0].mxu0
        %v637 = vadd.f32 0.0, %v636
        %v638 = vpop.f32.mrb[0].mxu0
        %v639 = vadd.f32 0.0, %v638
        %640 = vmatprep.mubr.bf16.mxu0 0
        %641 = vmatmul.mubr.bf16.gmra.mrb[0].mxu0 %v397
        %v642 = vpop.f32.mrb[0].mxu0
        %v643 = vadd.f32 0.0, %v642
        %v644 = vpop.f32.mrb[0].mxu0
        %v645 = vadd.f32 0.0, %v644
        %v646 = vpop.f32.mrb[0].mxu0
        %v647 = vadd.f32 0.0, %v646
        %v648 = vpop.f32.mrb[0].mxu0
        %v649 = vadd.f32 0.0, %v648
        %650 = vmatprep.mubr.bf16.mxu0 0
        %651 = vmatmul.mubr.bf16.gmra.mrb[0].mxu0 %v400
        %v652 = vpop.f32.mrb[0].mxu0
        %v653 = vadd.f32 0.0, %v652
        %v654 = vpop.f32.mrb[0].mxu0
        %v655 = vadd.f32 0.0, %v654
        %v656 = vpop.f32.mrb[0].mxu0
        %v657 = vadd.f32 0.0, %v656
        %v658 = vpop.f32.mrb[0].mxu0
        %v659 = vadd.f32 0.0, %v658
        %660 = vmatprep.mubr.bf16.mxu0 0
        %661 = vmatmul.mubr.bf16.gmra.mrb[0].mxu0 %v403
        %v662 = vpop.f32.mrb[0].mxu0
        %v663 = vadd.f32 0.0, %v662
        %v664 = vpop.f32.mrb[0].mxu0
        %v665 = vadd.f32 0.0, %v664
        %v666 = vpop.f32.mrb[0].mxu0
        %v667 = vadd.f32 0.0, %v666
        %v668 = vpop.f32.mrb[0].mxu0
        %v669 = vadd.f32 0.0, %v668
        %670 = vmatprep.mubr.bf16.mxu0 0
        %671 = vmatmul.mubr.bf16.gmra.mrb[0].mxu0 %v406
        %v672 = vpop.f32.mrb[0].mxu0
        %v673 = vadd.f32 0.0, %v672
        %v674 = vpop.f32.mrb[0].mxu0
        %v675 = vadd.f32 0.0, %v674
        %v676 = vpop.f32.mrb[0].mxu0
        %v677 = vadd.f32 0.0, %v676
        %v678 = vpop.f32.mrb[0].mxu0
        %v679 = vadd.f32 0.0, %v678
        %680 = vdwg.mxu0
        %v681 = vmax.f32 %v443, %v453
        %v682 = vmax.f32 %v447, %v457
        %v683 = vmax.f32 %v681, %v682
        %v684 = vrot.slane %v683, 4
        %v685 = vmax.f32 %v683, %v684
        %v686 = vrot.slane %v685, 2
        %v687 = vmax.f32 %v685, %v686
        %v688 = vrot.slane %v687, 1
        %v689 = vmax.f32 %v687, %v688
        %v690 = vmax.f32 %v445, %v455
        %v691 = vmax.f32 %v449, %v459
        %v692 = vmax.f32 %v690, %v691
        %v693 = vrot.slane %v692, 4
        %v694 = vmax.f32 %v692, %v693
        %v695 = vrot.slane %v694, 2
        %v696 = vmax.f32 %v694, %v695
        %v697 = vrot.slane %v696, 1
        %v698 = vmax.f32 %v696, %v697
        %v699 = vsub.f32 %v443, %v689
        %v700 = vsub.f32 %v445, %v698
        %v701 = vsub.f32 %v447, %v689
        %v702 = vsub.f32 %v449, %v698
        %v703 = vsub.f32 %v453, %v689
        %v704 = vsub.f32 %v455, %v698
        %v705 = vsub.f32 %v457, %v689
        %v706 = vsub.f32 %v459, %v698
        %v707 = vmul.f32 %v699, 1.442695
        %v708 = vpow.pop %v707
        %v709 = vmul.f32 %v700, 1.442695
        %v710 = vpow.pop %v709
        %v711 = vmul.f32 %v701, 1.442695
        %v712 = vpow.pop %v711
        %v713 = vmul.f32 %v702, 1.442695
        %v714 = vpow.pop %v713
        %v715 = vmul.f32 %v703, 1.442695
        %v716 = vpow.pop %v715
        %v717 = vmul.f32 %v704, 1.442695
        %v718 = vpow.pop %v717
        %v719 = vmul.f32 %v705, 1.442695
        %v720 = vpow.pop %v719
        %v721 = vmul.f32 %v706, 1.442695
        %v722 = vpow.pop %v721
        %v723 = vadd.f32 %v708, %v712
        %v724 = vadd.f32 %v723, %v716
        %v725 = vadd.f32 %v724, %v720
        %v726 = vrot.slane %v725, 4
        %v727 = vadd.f32 %v725, %v726
        %v728 = vrot.slane %v727, 2
        %v729 = vadd.f32 %v727, %v728
        %v730 = vrot.slane %v729, 1
        %v731 = vadd.f32 %v729, %v730
        %v732 = vadd.f32 %v710, %v714
        %v733 = vadd.f32 %v732, %v718
        %v734 = vadd.f32 %v733, %v722
        %v735 = vrot.slane %v734, 4
        %v736 = vadd.f32 %v734, %v735
        %v737 = vrot.slane %v736, 2
        %v738 = vadd.f32 %v736, %v737
        %v739 = vrot.slane %v738, 1
        %v740 = vadd.f32 %v738, %v739
        %v741 = vrcp.pop %v731
        %v742 = vrcp.pop %v740
        %v743 = vmul.f32 %v708, %v741
        %v744 = vmul.f32 %v710, %v742
        %v745 = vmul.f32 %v712, %v741
        %v746 = vmul.f32 %v714, %v742
        %v747 = vmul.f32 %v716, %v741
        %v748 = vmul.f32 %v718, %v742
        %v749 = vmul.f32 %v720, %v741
        %v750 = vmul.f32 %v722, %v742
        %v751 = vmul.f32 %v743, 0.17677669
        %v752 = vmul.f32 %v744, 0.17677669
        %v753 = vmul.f32 %v745, 0.17677669
        %v754 = vmul.f32 %v746, 0.17677669
        %v755 = vmul.f32 %v747, 0.17677669
        %v756 = vmul.f32 %v748, 0.17677669
        %v757 = vmul.f32 %v749, 0.17677669
        %v758 = vmul.f32 %v750, 0.17677669
        %v759 = vmax.f32 %v523, %v525
        %760 = vmax.xlane.f32.xlu0 %v759
        %v761 = vpop.xlane.xlu0 %760
        %v762 = vmax.f32 %v527, %v529
        %763 = vmax.xlane.f32.xlu0 %v762
        %v764 = vpop.xlane.xlu0 %763
        %v765 = vmax.f32 %v533, %v535
        %766 = vmax.xlane.f32.xlu0 %v765
        %v767 = vpop.xlane.xlu0 %766
        %v768 = vmax.f32 %v537, %v539
        %769 = vmax.xlane.f32.xlu0 %v768
        %v770 = vpop.xlane.xlu0 %769
        %v771 = vsub.f32 %v523, %v761
        %v772 = vsub.f32 %v525, %v761
        %v773 = vsub.f32 %v527, %v764
        %v774 = vsub.f32 %v529, %v764
        %v775 = vsub.f32 %v533, %v767
        %v776 = vsub.f32 %v535, %v767
        %v777 = vsub.f32 %v537, %v770
        %v778 = vsub.f32 %v539, %v770
        %v779 = vmul.f32 %v771, 1.442695
        %v780 = vpow.pop %v779
        %v781 = vmul.f32 %v772, 1.442695
        %v782 = vpow.pop %v781
        %v783 = vmul.f32 %v773, 1.442695
        %v784 = vpow.pop %v783
        %v785 = vmul.f32 %v774, 1.442695
        %v786 = vpow.pop %v785
        %v787 = vmul.f32 %v775, 1.442695
        %v788 = vpow.pop %v787
        %v789 = vmul.f32 %v776, 1.442695
        %v790 = vpow.pop %v789
        %v791 = vmul.f32 %v777, 1.442695
        %v792 = vpow.pop %v791
        %v793 = vmul.f32 %v778, 1.442695
        %v794 = vpow.pop %v793
        %v795 = vadd.f32 %v780, %v782
        %796 = vadd.xlane.f32.xlu0 %v795
        %v797 = vpop.xlane.xlu0 %796
        %v798 = vadd.f32 %v784, %v786
        %799 = vadd.xlane.f32.xlu0 %v798
        %v800 = vpop.xlane.xlu0 %799
        %v801 = vadd.f32 %v788, %v790
        %802 = vadd.xlane.f32.xlu0 %v801
        %v803 = vpop.xlane.xlu0 %802
        %v804 = vadd.f32 %v792, %v794
        %805 = vadd.xlane.f32.xlu0 %v804
        %v806 = vpop.xlane.xlu0 %805
        %v807 = vrcp.pop %v797
        %v808 = vrcp.pop %v800
        %v809 = vrcp.pop %v803
        %v810 = vrcp.pop %v806
        %v811 = vmul.f32 %v780, %v807
        %v812 = vmul.f32 %v782, %v807
        %v813 = vmul.f32 %v784, %v808
        %v814 = vmul.f32 %v786, %v808
        %v815 = vmul.f32 %v788, %v809
        %v816 = vmul.f32 %v790, %v809
        %v817 = vmul.f32 %v792, %v810
        %v818 = vmul.f32 %v794, %v810
        %v819 = vpack.c.bf16 %v607, %v603
        %v820 = vpack.c.bf16 %v609, %v605
        %v821 = vpack.c.bf16 %v617, %v613
        %v822 = vpack.c.bf16 %v619, %v615
        %v823 = vpack.c.bf16 %v813, %v811
        %v824 = vpack.c.bf16 %v814, %v812
        %v825 = vpack.c.bf16 %v817, %v815
        %v826 = vpack.c.bf16 %v818, %v816
        %827 = vmatprep.subr.bf16.mxu0 %v824
        %828 = vmatpush1.bf16.xpose.msra.mxu0 %v823
        %829 = vmatprep.subr.bf16.mxu0 %v826
        %830 = vmatpush1.bf16.xpose.msra.mxu0 %v825
        %831 = vmatprep.subr.bf16.mxu0 0
        %832 = vmatpush1.bf16.xpose.msra.mxu0 0
        %833 = vmatprep.subr.bf16.mxu0 0
        %834 = vmatpush1.bf16.xpose.msra.mxu0 0
        %835 = vmatprep.subr.bf16.mxu0 0
        %836 = vmatpush1.bf16.xpose.msra.mxu0 0
        %837 = vmatprep.subr.bf16.mxu0 0
        %838 = vmatpush1.bf16.xpose.msra.mxu0 0
        %839 = vmatprep.subr.bf16.mxu0 0
        %840 = vmatpush1.bf16.xpose.msra.mxu0 0
        %841 = vmatprep.subr.bf16.mxu0 0
        %842 = vmatpush1.bf16.xpose.msra.mxu0 0
        %843 = vmatprep.subr.bf16.mxu0 0
        %844 = vmatpush1.bf16.xpose.msra.mxu0 0
        %845 = vmatprep.subr.bf16.mxu0 0
        %846 = vmatpush1.bf16.xpose.msra.mxu0 0
        %847 = vmatprep.subr.bf16.mxu0 0
        %848 = vmatpush1.bf16.xpose.msra.mxu0 0
        %849 = vmatprep.subr.bf16.mxu0 0
        %850 = vmatpush1.bf16.xpose.msra.mxu0 0
        %851 = vmatprep.subr.bf16.mxu0 0
        %852 = vmatpush1.bf16.xpose.msra.mxu0 0
        %853 = vmatprep.subr.bf16.mxu0 0
        %854 = vmatpush1.bf16.xpose.msra.mxu0 0
        %855 = vmatprep.subr.bf16.mxu0 0
        %856 = vmatpush1.bf16.xpose.msra.mxu0 0
        %857 = vmatprep.subr.bf16.mxu0 0
        %858 = vmatpush1.bf16.xpose.msra.mxu0 0
        %859 = vmatprep.mubr.bf16.mxu0 %v820
        %860 = vmatmul.mubr.bf16.gmra.mrb[0].mxu0 %v819
        %v861 = vpop.f32.mrb[0].mxu0
        %v862 = vadd.f32 0.0, %v861
        %v863 = vpop.f32.mrb[0].mxu0
        %v864 = vpop.f32.mrb[0].mxu0
        %v865 = vadd.f32 0.0, %v864
        %v866 = vpop.f32.mrb[0].mxu0
        %867 = vmatprep.mubr.bf16.mxu0 %v822
        %868 = vmatmul.mubr.bf16.gmra.mrb[0].mxu0 %v821
        %v869 = vpop.f32.mrb[0].mxu0
        %v870 = vadd.f32 0.0, %v869
        %v871 = vpop.f32.mrb[0].mxu0
        %v872 = vpop.f32.mrb[0].mxu0
        %v873 = vadd.f32 0.0, %v872
        %v874 = vpop.f32.mrb[0].mxu0
        %875 = vdwg.mxu0
        %v876 = vpack.c.bf16 %v865, %v862
        %v877 = vpack.c.bf16 %v873, %v870
        %v878 = vpack.c.bf16 %v753, %v751
        %v879 = vpack.c.bf16 %v754, %v752
        %v880 = vpack.c.bf16 %v757, %v755
        %v881 = vpack.c.bf16 %v758, %v756
        %v883 = vsel %vm335, %v876, 0
        %v886 = vsel %vm335, %v877, 0
        %888 = vmatprep.subr.bf16.mxu0 %v879
        %889 = vmatpush1.bf16.msra.mxu0 %v878
        %890 = vmatprep.subr.bf16.mxu0 %v881
        %891 = vmatpush1.bf16.msra.mxu0 %v880
        %892 = vmatprep.subr.bf16.mxu0 0
        %893 = vmatpush1.bf16.msra.mxu0 0
        %894 = vmatprep.subr.bf16.mxu0 0
        %895 = vmatpush1.bf16.msra.mxu0 0
        %896 = vmatprep.subr.bf16.mxu0 0
        %897 = vmatpush1.bf16.msra.mxu0 0
        %898 = vmatprep.subr.bf16.mxu0 0
        %899 = vmatpush1.bf16.msra.mxu0 0
        %900 = vmatprep.subr.bf16.mxu0 0
        %901 = vmatpush1.bf16.msra.mxu0 0
        %902 = vmatprep.subr.bf16.mxu0 0
        %903 = vmatpush1.bf16.msra.mxu0 0
        %904 = vmatprep.subr.bf16.mxu0 0
        %905 = vmatpush1.bf16.msra.mxu0 0
        %906 = vmatprep.subr.bf16.mxu0 0
        %907 = vmatpush1.bf16.msra.mxu0 0
        %908 = vmatprep.subr.bf16.mxu0 0
        %909 = vmatpush1.bf16.msra.mxu0 0
        %910 = vmatprep.subr.bf16.mxu0 0
        %911 = vmatpush1.bf16.msra.mxu0 0
        %912 = vmatprep.subr.bf16.mxu0 0
        %913 = vmatpush1.bf16.msra.mxu0 0
        %914 = vmatprep.subr.bf16.mxu0 0
        %915 = vmatpush1.bf16.msra.mxu0 0
        %916 = vmatprep.subr.bf16.mxu0 0
        %917 = vmatpush1.bf16.msra.mxu0 0
        %918 = vmatprep.subr.bf16.mxu0 0
        %919 = vmatpush1.bf16.msra.mxu0 0
        %920 = vmatprep.mubr.bf16.mxu0 0
        %921 = vmatmul.mubr.bf16.gmra.mrb[0].mxu0 %v883
        %v922 = vpop.f32.mrb[0].mxu0
        %v923 = vadd.f32 0.0, %v922
        %v924 = vpop.f32.mrb[0].mxu0
        %v925 = vadd.f32 0.0, %v924
        %v926 = vpop.f32.mrb[0].mxu0
        %v927 = vadd.f32 0.0, %v926
        %v928 = vpop.f32.mrb[0].mxu0
        %v929 = vadd.f32 0.0, %v928
        %930 = vmatprep.mubr.bf16.mxu0 0
        %931 = vmatmul.mubr.bf16.gmra.mrb[0].mxu0 %v886
        %v932 = vpop.f32.mrb[0].mxu0
        %v933 = vadd.f32 0.0, %v932
        %v934 = vpop.f32.mrb[0].mxu0
        %v935 = vadd.f32 0.0, %v934
        %v936 = vpop.f32.mrb[0].mxu0
        %v937 = vadd.f32 0.0, %v936
        %v938 = vpop.f32.mrb[0].mxu0
        %v939 = vadd.f32 0.0, %v938
        %940 = vdwg.mxu0
        %v941 = vmax.f32 %v463, %v473
        %v942 = vmax.f32 %v467, %v477
        %v943 = vmax.f32 %v941, %v942
        %v944 = vrot.slane %v943, 4
        %v945 = vmax.f32 %v943, %v944
        %v946 = vrot.slane %v945, 2
        %v947 = vmax.f32 %v945, %v946
        %v948 = vrot.slane %v947, 1
        %v949 = vmax.f32 %v947, %v948
        %v950 = vmax.f32 %v465, %v475
        %v951 = vmax.f32 %v469, %v479
        %v952 = vmax.f32 %v950, %v951
        %v953 = vrot.slane %v952, 4
        %v954 = vmax.f32 %v952, %v953
        %v955 = vrot.slane %v954, 2
        %v956 = vmax.f32 %v954, %v955
        %v957 = vrot.slane %v956, 1
        %v958 = vmax.f32 %v956, %v957
        %v959 = vsub.f32 %v463, %v949
        %v960 = vsub.f32 %v465, %v958
        %v961 = vsub.f32 %v467, %v949
        %v962 = vsub.f32 %v469, %v958
        %v963 = vsub.f32 %v473, %v949
        %v964 = vsub.f32 %v475, %v958
        %v965 = vsub.f32 %v477, %v949
        %v966 = vsub.f32 %v479, %v958
        %v967 = vmul.f32 %v959, 1.442695
        %v968 = vpow.pop %v967
        %v969 = vmul.f32 %v960, 1.442695
        %v970 = vpow.pop %v969
        %v971 = vmul.f32 %v961, 1.442695
        %v972 = vpow.pop %v971
        %v973 = vmul.f32 %v962, 1.442695
        %v974 = vpow.pop %v973
        %v975 = vmul.f32 %v963, 1.442695
        %v976 = vpow.pop %v975
        %v977 = vmul.f32 %v964, 1.442695
        %v978 = vpow.pop %v977
        %v979 = vmul.f32 %v965, 1.442695
        %v980 = vpow.pop %v979
        %v981 = vmul.f32 %v966, 1.442695
        %v982 = vpow.pop %v981
        %v983 = vadd.f32 %v968, %v972
        %v984 = vadd.f32 %v983, %v976
        %v985 = vadd.f32 %v984, %v980
        %v986 = vrot.slane %v985, 4
        %v987 = vadd.f32 %v985, %v986
        %v988 = vrot.slane %v987, 2
        %v989 = vadd.f32 %v987, %v988
        %v990 = vrot.slane %v989, 1
        %v991 = vadd.f32 %v989, %v990
        %v992 = vadd.f32 %v970, %v974
        %v993 = vadd.f32 %v992, %v978
        %v994 = vadd.f32 %v993, %v982
        %v995 = vrot.slane %v994, 4
        %v996 = vadd.f32 %v994, %v995
        %v997 = vrot.slane %v996, 2
        %v998 = vadd.f32 %v996, %v997
        %v999 = vrot.slane %v998, 1
        %v1000 = vadd.f32 %v998, %v999
        %v1001 = vrcp.pop %v991
        %v1002 = vrcp.pop %v1000
        %v1003 = vmul.f32 %v968, %v1001
        %v1004 = vmul.f32 %v970, %v1002
        %v1005 = vmul.f32 %v972, %v1001
        %v1006 = vmul.f32 %v974, %v1002
        %v1007 = vmul.f32 %v976, %v1001
        %v1008 = vmul.f32 %v978, %v1002
        %v1009 = vmul.f32 %v980, %v1001
        %v1010 = vmul.f32 %v982, %v1002
        %v1011 = vmul.f32 %v1003, 0.17677669
        %v1012 = vmul.f32 %v1004, 0.17677669
        %v1013 = vmul.f32 %v1005, 0.17677669
        %v1014 = vmul.f32 %v1006, 0.17677669
        %v1015 = vmul.f32 %v1007, 0.17677669
        %v1016 = vmul.f32 %v1008, 0.17677669
        %v1017 = vmul.f32 %v1009, 0.17677669
        %v1018 = vmul.f32 %v1010, 0.17677669
        %v1019 = vmax.f32 %v543, %v545
        %1020 = vmax.xlane.f32.xlu0 %v1019
        %v1021 = vpop.xlane.xlu0 %1020
        %v1022 = vmax.f32 %v547, %v549
        %1023 = vmax.xlane.f32.xlu0 %v1022
        %v1024 = vpop.xlane.xlu0 %1023
        %v1025 = vmax.f32 %v553, %v555
        %1026 = vmax.xlane.f32.xlu0 %v1025
        %v1027 = vpop.xlane.xlu0 %1026
        %v1028 = vmax.f32 %v557, %v559
        %1029 = vmax.xlane.f32.xlu0 %v1028
        %v1030 = vpop.xlane.xlu0 %1029
        %v1031 = vsub.f32 %v543, %v1021
        %v1032 = vsub.f32 %v545, %v1021
        %v1033 = vsub.f32 %v547, %v1024
        %v1034 = vsub.f32 %v549, %v1024
        %v1035 = vsub.f32 %v553, %v1027
        %v1036 = vsub.f32 %v555, %v1027
        %v1037 = vsub.f32 %v557, %v1030
        %v1038 = vsub.f32 %v559, %v1030
        %v1039 = vmul.f32 %v1031, 1.442695
        %v1040 = vpow.pop %v1039
        %v1041 = vmul.f32 %v1032, 1.442695
        %v1042 = vpow.pop %v1041
        %v1043 = vmul.f32 %v1033, 1.442695
        %v1044 = vpow.pop %v1043
        %v1045 = vmul.f32 %v1034, 1.442695
        %v1046 = vpow.pop %v1045
        %v1047 = vmul.f32 %v1035, 1.442695
        %v1048 = vpow.pop %v1047
        %v1049 = vmul.f32 %v1036, 1.442695
        %v1050 = vpow.pop %v1049
        %v1051 = vmul.f32 %v1037, 1.442695
        %v1052 = vpow.pop %v1051
        %v1053 = vmul.f32 %v1038, 1.442695
        %v1054 = vpow.pop %v1053
        %v1055 = vadd.f32 %v1040, %v1042
        %1056 = vadd.xlane.f32.xlu0 %v1055
        %v1057 = vpop.xlane.xlu0 %1056
        %v1058 = vadd.f32 %v1044, %v1046
        %1059 = vadd.xlane.f32.xlu0 %v1058
        %v1060 = vpop.xlane.xlu0 %1059
        %v1061 = vadd.f32 %v1048, %v1050
        %1062 = vadd.xlane.f32.xlu0 %v1061
        %v1063 = vpop.xlane.xlu0 %1062
        %v1064 = vadd.f32 %v1052, %v1054
        %1065 = vadd.xlane.f32.xlu0 %v1064
        %v1066 = vpop.xlane.xlu0 %1065
        %v1067 = vrcp.pop %v1057
        %v1068 = vrcp.pop %v1060
        %v1069 = vrcp.pop %v1063
        %v1070 = vrcp.pop %v1066
        %v1071 = vmul.f32 %v1040, %v1067
        %v1072 = vmul.f32 %v1042, %v1067
        %v1073 = vmul.f32 %v1044, %v1068
        %v1074 = vmul.f32 %v1046, %v1068
        %v1075 = vmul.f32 %v1048, %v1069
        %v1076 = vmul.f32 %v1050, %v1069
        %v1077 = vmul.f32 %v1052, %v1070
        %v1078 = vmul.f32 %v1054, %v1070
        %v1079 = vpack.c.bf16 %v627, %v623
        %v1080 = vpack.c.bf16 %v629, %v625
        %v1081 = vpack.c.bf16 %v637, %v633
        %v1082 = vpack.c.bf16 %v639, %v635
        %v1083 = vpack.c.bf16 %v1073, %v1071
        %v1084 = vpack.c.bf16 %v1074, %v1072
        %v1085 = vpack.c.bf16 %v1077, %v1075
        %v1086 = vpack.c.bf16 %v1078, %v1076
        %1087 = vmatprep.subr.bf16.mxu0 %v1084
        %1088 = vmatpush1.bf16.xpose.msra.mxu0 %v1083
        %1089 = vmatprep.subr.bf16.mxu0 %v1086
        %1090 = vmatpush1.bf16.xpose.msra.mxu0 %v1085
        %1091 = vmatprep.subr.bf16.mxu0 0
        %1092 = vmatpush1.bf16.xpose.msra.mxu0 0
        %1093 = vmatprep.subr.bf16.mxu0 0
        %1094 = vmatpush1.bf16.xpose.msra.mxu0 0
        %1095 = vmatprep.subr.bf16.mxu0 0
        %1096 = vmatpush1.bf16.xpose.msra.mxu0 0
        %1097 = vmatprep.subr.bf16.mxu0 0
        %1098 = vmatpush1.bf16.xpose.msra.mxu0 0
        %1099 = vmatprep.subr.bf16.mxu0 0
        %1100 = vmatpush1.bf16.xpose.msra.mxu0 0
        %1101 = vmatprep.subr.bf16.mxu0 0
        %1102 = vmatpush1.bf16.xpose.msra.mxu0 0
        %1103 = vmatprep.subr.bf16.mxu0 0
        %1104 = vmatpush1.bf16.xpose.msra.mxu0 0
        %1105 = vmatprep.subr.bf16.mxu0 0
        %1106 = vmatpush1.bf16.xpose.msra.mxu0 0
        %1107 = vmatprep.subr.bf16.mxu0 0
        %1108 = vmatpush1.bf16.xpose.msra.mxu0 0
        %1109 = vmatprep.subr.bf16.mxu0 0
        %1110 = vmatpush1.bf16.xpose.msra.mxu0 0
        %1111 = vmatprep.subr.bf16.mxu0 0
        %1112 = vmatpush1.bf16.xpose.msra.mxu0 0
        %1113 = vmatprep.subr.bf16.mxu0 0
        %1114 = vmatpush1.bf16.xpose.msra.mxu0 0
        %1115 = vmatprep.subr.bf16.mxu0 0
        %1116 = vmatpush1.bf16.xpose.msra.mxu0 0
        %1117 = vmatprep.subr.bf16.mxu0 0
        %1118 = vmatpush1.bf16.xpose.msra.mxu0 0
        %1119 = vmatprep.mubr.bf16.mxu0 %v1080
        %1120 = vmatmul.mubr.bf16.gmra.mrb[0].mxu0 %v1079
        %v1121 = vpop.f32.mrb[0].mxu0
        %v1122 = vadd.f32 0.0, %v1121
        %v1123 = vpop.f32.mrb[0].mxu0
        %v1124 = vpop.f32.mrb[0].mxu0
        %v1125 = vadd.f32 0.0, %v1124
        %v1126 = vpop.f32.mrb[0].mxu0
        %1127 = vmatprep.mubr.bf16.mxu0 %v1082
        %1128 = vmatmul.mubr.bf16.gmra.mrb[0].mxu0 %v1081
        %v1129 = vpop.f32.mrb[0].mxu0
        %v1130 = vadd.f32 0.0, %v1129
        %v1131 = vpop.f32.mrb[0].mxu0
        %v1132 = vpop.f32.mrb[0].mxu0
        %v1133 = vadd.f32 0.0, %v1132
        %v1134 = vpop.f32.mrb[0].mxu0
        %1135 = vdwg.mxu0
        %v1136 = vpack.c.bf16 %v1125, %v1122
        %v1137 = vpack.c.bf16 %v1133, %v1130
        %v1138 = vpack.c.bf16 %v1013, %v1011
        %v1139 = vpack.c.bf16 %v1014, %v1012
        %v1140 = vpack.c.bf16 %v1017, %v1015
        %v1141 = vpack.c.bf16 %v1018, %v1016
        %v1143 = vsel %vm335, %v1136, 0
        %v1146 = vsel %vm335, %v1137, 0
        %1148 = vmatprep.subr.bf16.mxu0 %v1139
        %1149 = vmatpush1.bf16.msra.mxu0 %v1138
        %1150 = vmatprep.subr.bf16.mxu0 %v1141
        %1151 = vmatpush1.bf16.msra.mxu0 %v1140
        %1152 = vmatprep.subr.bf16.mxu0 0
        %1153 = vmatpush1.bf16.msra.mxu0 0
        %1154 = vmatprep.subr.bf16.mxu0 0
        %1155 = vmatpush1.bf16.msra.mxu0 0
        %1156 = vmatprep.subr.bf16.mxu0 0
        %1157 = vmatpush1.bf16.msra.mxu0 0
        %1158 = vmatprep.subr.bf16.mxu0 0
        %1159 = vmatpush1.bf16.msra.mxu0 0
        %1160 = vmatprep.subr.bf16.mxu0 0
        %1161 = vmatpush1.bf16.msra.mxu0 0
        %1162 = vmatprep.subr.bf16.mxu0 0
        %1163 = vmatpush1.bf16.msra.mxu0 0
        %1164 = vmatprep.subr.bf16.mxu0 0
        %1165 = vmatpush1.bf16.msra.mxu0 0
        %1166 = vmatprep.subr.bf16.mxu0 0
        %1167 = vmatpush1.bf16.msra.mxu0 0
        %1168 = vmatprep.subr.bf16.mxu0 0
        %1169 = vmatpush1.bf16.msra.mxu0 0
        %1170 = vmatprep.subr.bf16.mxu0 0
        %1171 = vmatpush1.bf16.msra.mxu0 0
        %1172 = vmatprep.subr.bf16.mxu0 0
        %1173 = vmatpush1.bf16.msra.mxu0 0
        %1174 = vmatprep.subr.bf16.mxu0 0
        %1175 = vmatpush1.bf16.msra.mxu0 0
        %1176 = vmatprep.subr.bf16.mxu0 0
        %1177 = vmatpush1.bf16.msra.mxu0 0
        %1178 = vmatprep.subr.bf16.mxu0 0
        %1179 = vmatpush1.bf16.msra.mxu0 0
        %1180 = vmatprep.mubr.bf16.mxu0 0
        %1181 = vmatmul.mubr.bf16.gmra.mrb[0].mxu0 %v1143
        %v1182 = vpop.f32.mrb[0].mxu0
        %v1183 = vadd.f32 0.0, %v1182
        %v1184 = vpop.f32.mrb[0].mxu0
        %v1185 = vadd.f32 0.0, %v1184
        %v1186 = vpop.f32.mrb[0].mxu0
        %v1187 = vadd.f32 0.0, %v1186
        %v1188 = vpop.f32.mrb[0].mxu0
        %v1189 = vadd.f32 0.0, %v1188
        %1190 = vmatprep.mubr.bf16.mxu0 0
        %1191 = vmatmul.mubr.bf16.gmra.mrb[0].mxu0 %v1146
        %v1192 = vpop.f32.mrb[0].mxu0
        %v1193 = vadd.f32 0.0, %v1192
        %v1194 = vpop.f32.mrb[0].mxu0
        %v1195 = vadd.f32 0.0, %v1194
        %v1196 = vpop.f32.mrb[0].mxu0
        %v1197 = vadd.f32 0.0, %v1196
        %v1198 = vpop.f32.mrb[0].mxu0
        %v1199 = vadd.f32 0.0, %v1198
        %1200 = vdwg.mxu0
        %v1201 = vmax.f32 %v483, %v493
        %v1202 = vmax.f32 %v487, %v497
        %v1203 = vmax.f32 %v1201, %v1202
        %v1204 = vrot.slane %v1203, 4
        %v1205 = vmax.f32 %v1203, %v1204
        %v1206 = vrot.slane %v1205, 2
        %v1207 = vmax.f32 %v1205, %v1206
        %v1208 = vrot.slane %v1207, 1
        %v1209 = vmax.f32 %v1207, %v1208
        %v1210 = vmax.f32 %v485, %v495
        %v1211 = vmax.f32 %v489, %v499
        %v1212 = vmax.f32 %v1210, %v1211
        %v1213 = vrot.slane %v1212, 4
        %v1214 = vmax.f32 %v1212, %v1213
        %v1215 = vrot.slane %v1214, 2
        %v1216 = vmax.f32 %v1214, %v1215
        %v1217 = vrot.slane %v1216, 1
        %v1218 = vmax.f32 %v1216, %v1217
        %v1219 = vsub.f32 %v483, %v1209
        %v1220 = vsub.f32 %v485, %v1218
        %v1221 = vsub.f32 %v487, %v1209
        %v1222 = vsub.f32 %v489, %v1218
        %v1223 = vsub.f32 %v493, %v1209
        %v1224 = vsub.f32 %v495, %v1218
        %v1225 = vsub.f32 %v497, %v1209
        %v1226 = vsub.f32 %v499, %v1218
        %v1227 = vmul.f32 %v1219, 1.442695
        %v1228 = vpow.pop %v1227
        %v1229 = vmul.f32 %v1220, 1.442695
        %v1230 = vpow.pop %v1229
        %v1231 = vmul.f32 %v1221, 1.442695
        %v1232 = vpow.pop %v1231
        %v1233 = vmul.f32 %v1222, 1.442695
        %v1234 = vpow.pop %v1233
        %v1235 = vmul.f32 %v1223, 1.442695
        %v1236 = vpow.pop %v1235
        %v1237 = vmul.f32 %v1224, 1.442695
        %v1238 = vpow.pop %v1237
        %v1239 = vmul.f32 %v1225, 1.442695
        %v1240 = vpow.pop %v1239
        %v1241 = vmul.f32 %v1226, 1.442695
        %v1242 = vpow.pop %v1241
        %v1243 = vadd.f32 %v1228, %v1232
        %v1244 = vadd.f32 %v1243, %v1236
        %v1245 = vadd.f32 %v1244, %v1240
        %v1246 = vrot.slane %v1245, 4
        %v1247 = vadd.f32 %v1245, %v1246
        %v1248 = vrot.slane %v1247, 2
        %v1249 = vadd.f32 %v1247, %v1248
        %v1250 = vrot.slane %v1249, 1
        %v1251 = vadd.f32 %v1249, %v1250
        %v1252 = vadd.f32 %v1230, %v1234
        %v1253 = vadd.f32 %v1252, %v1238
        %v1254 = vadd.f32 %v1253, %v1242
        %v1255 = vrot.slane %v1254, 4
        %v1256 = vadd.f32 %v1254, %v1255
        %v1257 = vrot.slane %v1256, 2
        %v1258 = vadd.f32 %v1256, %v1257
        %v1259 = vrot.slane %v1258, 1
        %v1260 = vadd.f32 %v1258, %v1259
        %v1261 = vrcp.pop %v1251
        %v1262 = vrcp.pop %v1260
        %v1263 = vmul.f32 %v1228, %v1261
        %v1264 = vmul.f32 %v1230, %v1262
        %v1265 = vmul.f32 %v1232, %v1261
        %v1266 = vmul.f32 %v1234, %v1262
        %v1267 = vmul.f32 %v1236, %v1261
        %v1268 = vmul.f32 %v1238, %v1262
        %v1269 = vmul.f32 %v1240, %v1261
        %v1270 = vmul.f32 %v1242, %v1262
        %v1271 = vmul.f32 %v1263, 0.17677669
        %v1272 = vmul.f32 %v1264, 0.17677669
        %v1273 = vmul.f32 %v1265, 0.17677669
        %v1274 = vmul.f32 %v1266, 0.17677669
        %v1275 = vmul.f32 %v1267, 0.17677669
        %v1276 = vmul.f32 %v1268, 0.17677669
        %v1277 = vmul.f32 %v1269, 0.17677669
        %v1278 = vmul.f32 %v1270, 0.17677669
        %v1279 = vmax.f32 %v563, %v565
        %1280 = vmax.xlane.f32.xlu0 %v1279
        %v1281 = vpop.xlane.xlu0 %1280
        %v1282 = vmax.f32 %v567, %v569
        %1283 = vmax.xlane.f32.xlu0 %v1282
        %v1284 = vpop.xlane.xlu0 %1283
        %v1285 = vmax.f32 %v573, %v575
        %1286 = vmax.xlane.f32.xlu0 %v1285
        %v1287 = vpop.xlane.xlu0 %1286
        %v1288 = vmax.f32 %v577, %v579
        %1289 = vmax.xlane.f32.xlu0 %v1288
        %v1290 = vpop.xlane.xlu0 %1289
        %v1291 = vsub.f32 %v563, %v1281
        %v1292 = vsub.f32 %v565, %v1281
        %v1293 = vsub.f32 %v567, %v1284
        %v1294 = vsub.f32 %v569, %v1284
        %v1295 = vsub.f32 %v573, %v1287
        %v1296 = vsub.f32 %v575, %v1287
        %v1297 = vsub.f32 %v577, %v1290
        %v1298 = vsub.f32 %v579, %v1290
        %v1299 = vmul.f32 %v1291, 1.442695
        %v1300 = vpow.pop %v1299
        %v1301 = vmul.f32 %v1292, 1.442695
        %v1302 = vpow.pop %v1301
        %v1303 = vmul.f32 %v1293, 1.442695
        %v1304 = vpow.pop %v1303
        %v1305 = vmul.f32 %v1294, 1.442695
        %v1306 = vpow.pop %v1305
        %v1307 = vmul.f32 %v1295, 1.442695
        %v1308 = vpow.pop %v1307
        %v1309 = vmul.f32 %v1296, 1.442695
        %v1310 = vpow.pop %v1309
        %v1311 = vmul.f32 %v1297, 1.442695
        %v1312 = vpow.pop %v1311
        %v1313 = vmul.f32 %v1298, 1.442695
        %v1314 = vpow.pop %v1313
        %v1315 = vadd.f32 %v1300, %v1302
        %1316 = vadd.xlane.f32.xlu0 %v1315
        %v1317 = vpop.xlane.xlu0 %1316
        %v1318 = vadd.f32 %v1304, %v1306
        %1319 = vadd.xlane.f32.xlu0 %v1318
        %v1320 = vpop.xlane.xlu0 %1319
        %v1321 = vadd.f32 %v1308, %v1310
        %1322 = vadd.xlane.f32.xlu0 %v1321
        %v1323 = vpop.xlane.xlu0 %1322
        %v1324 = vadd.f32 %v1312, %v1314
        %1325 = vadd.xlane.f32.xlu0 %v1324
        %v1326 = vpop.xlane.xlu0 %1325
        %v1327 = vrcp.pop %v1317
        %v1328 = vrcp.pop %v1320
        %v1329 = vrcp.pop %v1323
        %v1330 = vrcp.pop %v1326
        %v1331 = vmul.f32 %v1300, %v1327
        %v1332 = vmul.f32 %v1302, %v1327
        %v1333 = vmul.f32 %v1304, %v1328
        %v1334 = vmul.f32 %v1306, %v1328
        %v1335 = vmul.f32 %v1308, %v1329
        %v1336 = vmul.f32 %v1310, %v1329
        %v1337 = vmul.f32 %v1312, %v1330
        %v1338 = vmul.f32 %v1314, %v1330
        %v1339 = vpack.c.bf16 %v647, %v643
        %v1340 = vpack.c.bf16 %v649, %v645
        %v1341 = vpack.c.bf16 %v657, %v653
        %v1342 = vpack.c.bf16 %v659, %v655
        %v1343 = vpack.c.bf16 %v1333, %v1331
        %v1344 = vpack.c.bf16 %v1334, %v1332
        %v1345 = vpack.c.bf16 %v1337, %v1335
        %v1346 = vpack.c.bf16 %v1338, %v1336
        %1347 = vmatprep.subr.bf16.mxu0 %v1344
        %1348 = vmatpush1.bf16.xpose.msra.mxu0 %v1343
        %1349 = vmatprep.subr.bf16.mxu0 %v1346
        %1350 = vmatpush1.bf16.xpose.msra.mxu0 %v1345
        %1351 = vmatprep.subr.bf16.mxu0 0
        %1352 = vmatpush1.bf16.xpose.msra.mxu0 0
        %1353 = vmatprep.subr.bf16.mxu0 0
        %1354 = vmatpush1.bf16.xpose.msra.mxu0 0
        %1355 = vmatprep.subr.bf16.mxu0 0
        %1356 = vmatpush1.bf16.xpose.msra.mxu0 0
        %1357 = vmatprep.subr.bf16.mxu0 0
        %1358 = vmatpush1.bf16.xpose.msra.mxu0 0
        %1359 = vmatprep.subr.bf16.mxu0 0
        %1360 = vmatpush1.bf16.xpose.msra.mxu0 0
        %1361 = vmatprep.subr.bf16.mxu0 0
        %1362 = vmatpush1.bf16.xpose.msra.mxu0 0
        %1363 = vmatprep.subr.bf16.mxu0 0
        %1364 = vmatpush1.bf16.xpose.msra.mxu0 0
        %1365 = vmatprep.subr.bf16.mxu0 0
        %1366 = vmatpush1.bf16.xpose.msra.mxu0 0
        %1367 = vmatprep.subr.bf16.mxu0 0
        %1368 = vmatpush1.bf16.xpose.msra.mxu0 0
        %1369 = vmatprep.subr.bf16.mxu0 0
        %1370 = vmatpush1.bf16.xpose.msra.mxu0 0
        %1371 = vmatprep.subr.bf16.mxu0 0
        %1372 = vmatpush1.bf16.xpose.msra.mxu0 0
        %1373 = vmatprep.subr.bf16.mxu0 0
        %1374 = vmatpush1.bf16.xpose.msra.mxu0 0
        %1375 = vmatprep.subr.bf16.mxu0 0
        %1376 = vmatpush1.bf16.xpose.msra.mxu0 0
        %1377 = vmatprep.subr.bf16.mxu0 0
        %1378 = vmatpush1.bf16.xpose.msra.mxu0 0
        %1379 = vmatprep.mubr.bf16.mxu0 %v1340
        %1380 = vmatmul.mubr.bf16.gmra.mrb[0].mxu0 %v1339
        %v1381 = vpop.f32.mrb[0].mxu0
        %v1382 = vadd.f32 0.0, %v1381
        %v1383 = vpop.f32.mrb[0].mxu0
        %v1384 = vpop.f32.mrb[0].mxu0
        %v1385 = vadd.f32 0.0, %v1384
        %v1386 = vpop.f32.mrb[0].mxu0
        %1387 = vmatprep.mubr.bf16.mxu0 %v1342
        %1388 = vmatmul.mubr.bf16.gmra.mrb[0].mxu0 %v1341
        %v1389 = vpop.f32.mrb[0].mxu0
        %v1390 = vadd.f32 0.0, %v1389
        %v1391 = vpop.f32.mrb[0].mxu0
        %v1392 = vpop.f32.mrb[0].mxu0
        %v1393 = vadd.f32 0.0, %v1392
        %v1394 = vpop.f32.mrb[0].mxu0
        %1395 = vdwg.mxu0
        %v1396 = vpack.c.bf16 %v1385, %v1382
        %v1397 = vpack.c.bf16 %v1393, %v1390
        %v1398 = vpack.c.bf16 %v1273, %v1271
        %v1399 = vpack.c.bf16 %v1274, %v1272
        %v1400 = vpack.c.bf16 %v1277, %v1275
        %v1401 = vpack.c.bf16 %v1278, %v1276
        %v1403 = vsel %vm335, %v1396, 0
        %v1406 = vsel %vm335, %v1397, 0
        %1408 = vmatprep.subr.bf16.mxu0 %v1399
        %1409 = vmatpush1.bf16.msra.mxu0 %v1398
        %1410 = vmatprep.subr.bf16.mxu0 %v1401
        %1411 = vmatpush1.bf16.msra.mxu0 %v1400
        %1412 = vmatprep.subr.bf16.mxu0 0
        %1413 = vmatpush1.bf16.msra.mxu0 0
        %1414 = vmatprep.subr.bf16.mxu0 0
        %1415 = vmatpush1.bf16.msra.mxu0 0
        %1416 = vmatprep.subr.bf16.mxu0 0
        %1417 = vmatpush1.bf16.msra.mxu0 0
        %1418 = vmatprep.subr.bf16.mxu0 0
        %1419 = vmatpush1.bf16.msra.mxu0 0
        %1420 = vmatprep.subr.bf16.mxu0 0
        %1421 = vmatpush1.bf16.msra.mxu0 0
        %1422 = vmatprep.subr.bf16.mxu0 0
        %1423 = vmatpush1.bf16.msra.mxu0 0
        %1424 = vmatprep.subr.bf16.mxu0 0
        %1425 = vmatpush1.bf16.msra.mxu0 0
        %1426 = vmatprep.subr.bf16.mxu0 0
        %1427 = vmatpush1.bf16.msra.mxu0 0
        %1428 = vmatprep.subr.bf16.mxu0 0
        %1429 = vmatpush1.bf16.msra.mxu0 0
        %1430 = vmatprep.subr.bf16.mxu0 0
        %1431 = vmatpush1.bf16.msra.mxu0 0
        %1432 = vmatprep.subr.bf16.mxu0 0
        %1433 = vmatpush1.bf16.msra.mxu0 0
        %1434 = vmatprep.subr.bf16.mxu0 0
        %1435 = vmatpush1.bf16.msra.mxu0 0
        %1436 = vmatprep.subr.bf16.mxu0 0
        %1437 = vmatpush1.bf16.msra.mxu0 0
        %1438 = vmatprep.subr.bf16.mxu0 0
        %1439 = vmatpush1.bf16.msra.mxu0 0
        %1440 = vmatprep.mubr.bf16.mxu0 0
        %1441 = vmatmul.mubr.bf16.gmra.mrb[0].mxu0 %v1403
        %v1442 = vpop.f32.mrb[0].mxu0
        %v1443 = vadd.f32 0.0, %v1442
        %v1444 = vpop.f32.mrb[0].mxu0
        %v1445 = vadd.f32 0.0, %v1444
        %v1446 = vpop.f32.mrb[0].mxu0
        %v1447 = vadd.f32 0.0, %v1446
        %v1448 = vpop.f32.mrb[0].mxu0
        %v1449 = vadd.f32 0.0, %v1448
        %1450 = vmatprep.mubr.bf16.mxu0 0
        %1451 = vmatmul.mubr.bf16.gmra.mrb[0].mxu0 %v1406
        %v1452 = vpop.f32.mrb[0].mxu0
        %v1453 = vadd.f32 0.0, %v1452
        %v1454 = vpop.f32.mrb[0].mxu0
        %v1455 = vadd.f32 0.0, %v1454
        %v1456 = vpop.f32.mrb[0].mxu0
        %v1457 = vadd.f32 0.0, %v1456
        %v1458 = vpop.f32.mrb[0].mxu0
        %v1459 = vadd.f32 0.0, %v1458
        %1460 = vdwg.mxu0
        %v1461 = vmax.f32 %v503, %v513
        %v1462 = vmax.f32 %v507, %v517
        %v1463 = vmax.f32 %v1461, %v1462
        %v1464 = vrot.slane %v1463, 4
        %v1465 = vmax.f32 %v1463, %v1464
        %v1466 = vrot.slane %v1465, 2
        %v1467 = vmax.f32 %v1465, %v1466
        %v1468 = vrot.slane %v1467, 1
        %v1469 = vmax.f32 %v1467, %v1468
        %v1470 = vmax.f32 %v505, %v515
        %v1471 = vmax.f32 %v509, %v519
        %v1472 = vmax.f32 %v1470, %v1471
        %v1473 = vrot.slane %v1472, 4
        %v1474 = vmax.f32 %v1472, %v1473
        %v1475 = vrot.slane %v1474, 2
        %v1476 = vmax.f32 %v1474, %v1475
        %v1477 = vrot.slane %v1476, 1
        %v1478 = vmax.f32 %v1476, %v1477
        %v1479 = vsub.f32 %v503, %v1469
        %v1480 = vsub.f32 %v505, %v1478
        %v1481 = vsub.f32 %v507, %v1469
        %v1482 = vsub.f32 %v509, %v1478
        %v1483 = vsub.f32 %v513, %v1469
        %v1484 = vsub.f32 %v515, %v1478
        %v1485 = vsub.f32 %v517, %v1469
        %v1486 = vsub.f32 %v519, %v1478
        %v1487 = vmul.f32 %v1479, 1.442695
        %v1488 = vpow.pop %v1487
        %v1489 = vmul.f32 %v1480, 1.442695
        %v1490 = vpow.pop %v1489
        %v1491 = vmul.f32 %v1481, 1.442695
        %v1492 = vpow.pop %v1491
        %v1493 = vmul.f32 %v1482, 1.442695
        %v1494 = vpow.pop %v1493
        %v1495 = vmul.f32 %v1483, 1.442695
        %v1496 = vpow.pop %v1495
        %v1497 = vmul.f32 %v1484, 1.442695
        %v1498 = vpow.pop %v1497
        %v1499 = vmul.f32 %v1485, 1.442695
        %v1500 = vpow.pop %v1499
        %v1501 = vmul.f32 %v1486, 1.442695
        %v1502 = vpow.pop %v1501
        %v1503 = vadd.f32 %v1488, %v1492
        %v1504 = vadd.f32 %v1503, %v1496
        %v1505 = vadd.f32 %v1504, %v1500
        %v1506 = vrot.slane %v1505, 4
        %v1507 = vadd.f32 %v1505, %v1506
        %v1508 = vrot.slane %v1507, 2
        %v1509 = vadd.f32 %v1507, %v1508
        %v1510 = vrot.slane %v1509, 1
        %v1511 = vadd.f32 %v1509, %v1510
        %v1512 = vadd.f32 %v1490, %v1494
        %v1513 = vadd.f32 %v1512, %v1498
        %v1514 = vadd.f32 %v1513, %v1502
        %v1515 = vrot.slane %v1514, 4
        %v1516 = vadd.f32 %v1514, %v1515
        %v1517 = vrot.slane %v1516, 2
        %v1518 = vadd.f32 %v1516, %v1517
        %v1519 = vrot.slane %v1518, 1
        %v1520 = vadd.f32 %v1518, %v1519
        %v1521 = vrcp.pop %v1511
        %v1522 = vrcp.pop %v1520
        %v1523 = vmul.f32 %v1488, %v1521
        %v1524 = vmul.f32 %v1490, %v1522
        %v1525 = vmul.f32 %v1492, %v1521
        %v1526 = vmul.f32 %v1494, %v1522
        %v1527 = vmul.f32 %v1496, %v1521
        %v1528 = vmul.f32 %v1498, %v1522
        %v1529 = vmul.f32 %v1500, %v1521
        %v1530 = vmul.f32 %v1502, %v1522
        %v1531 = vmul.f32 %v1523, 0.17677669
        %v1532 = vmul.f32 %v1524, 0.17677669
        %v1533 = vmul.f32 %v1525, 0.17677669
        %v1534 = vmul.f32 %v1526, 0.17677669
        %v1535 = vmul.f32 %v1527, 0.17677669
        %v1536 = vmul.f32 %v1528, 0.17677669
        %v1537 = vmul.f32 %v1529, 0.17677669
        %v1538 = vmul.f32 %v1530, 0.17677669
        %v1539 = vmax.f32 %v583, %v585
        %1540 = vmax.xlane.f32.xlu0 %v1539
        %v1541 = vpop.xlane.xlu0 %1540
        %v1542 = vmax.f32 %v587, %v589
        %1543 = vmax.xlane.f32.xlu0 %v1542
        %v1544 = vpop.xlane.xlu0 %1543
        %v1545 = vmax.f32 %v593, %v595
        %1546 = vmax.xlane.f32.xlu0 %v1545
        %v1547 = vpop.xlane.xlu0 %1546
        %v1548 = vmax.f32 %v597, %v599
        %1549 = vmax.xlane.f32.xlu0 %v1548
        %v1550 = vpop.xlane.xlu0 %1549
        %v1551 = vsub.f32 %v583, %v1541
        %v1552 = vsub.f32 %v585, %v1541
        %v1553 = vsub.f32 %v587, %v1544
        %v1554 = vsub.f32 %v589, %v1544
        %v1555 = vsub.f32 %v593, %v1547
        %v1556 = vsub.f32 %v595, %v1547
        %v1557 = vsub.f32 %v597, %v1550
        %v1558 = vsub.f32 %v599, %v1550
        %v1559 = vmul.f32 %v1551, 1.442695
        %v1560 = vpow.pop %v1559
        %v1561 = vmul.f32 %v1552, 1.442695
        %v1562 = vpow.pop %v1561
        %v1563 = vmul.f32 %v1553, 1.442695
        %v1564 = vpow.pop %v1563
        %v1565 = vmul.f32 %v1554, 1.442695
        %v1566 = vpow.pop %v1565
        %v1567 = vmul.f32 %v1555, 1.442695
        %v1568 = vpow.pop %v1567
        %v1569 = vmul.f32 %v1556, 1.442695
        %v1570 = vpow.pop %v1569
        %v1571 = vmul.f32 %v1557, 1.442695
        %v1572 = vpow.pop %v1571
        %v1573 = vmul.f32 %v1558, 1.442695
        %v1574 = vpow.pop %v1573
        %v1575 = vadd.f32 %v1560, %v1562
        %1576 = vadd.xlane.f32.xlu0 %v1575
        %v1577 = vpop.xlane.xlu0 %1576
        %v1578 = vadd.f32 %v1564, %v1566
        %1579 = vadd.xlane.f32.xlu0 %v1578
        %v1580 = vpop.xlane.xlu0 %1579
        %v1581 = vadd.f32 %v1568, %v1570
        %1582 = vadd.xlane.f32.xlu0 %v1581
        %v1583 = vpop.xlane.xlu0 %1582
        %v1584 = vadd.f32 %v1572, %v1574
        %1585 = vadd.xlane.f32.xlu0 %v1584
        %v1586 = vpop.xlane.xlu0 %1585
        %v1587 = vrcp.pop %v1577
        %v1588 = vrcp.pop %v1580
        %v1589 = vrcp.pop %v1583
        %v1590 = vrcp.pop %v1586
        %v1591 = vmul.f32 %v1560, %v1587
        %v1592 = vmul.f32 %v1562, %v1587
        %v1593 = vmul.f32 %v1564, %v1588
        %v1594 = vmul.f32 %v1566, %v1588
        %v1595 = vmul.f32 %v1568, %v1589
        %v1596 = vmul.f32 %v1570, %v1589
        %v1597 = vmul.f32 %v1572, %v1590
        %v1598 = vmul.f32 %v1574, %v1590
        %v1599 = vpack.c.bf16 %v667, %v663
        %v1600 = vpack.c.bf16 %v669, %v665
        %v1601 = vpack.c.bf16 %v677, %v673
        %v1602 = vpack.c.bf16 %v679, %v675
        %v1603 = vpack.c.bf16 %v1593, %v1591
        %v1604 = vpack.c.bf16 %v1594, %v1592
        %v1605 = vpack.c.bf16 %v1597, %v1595
        %v1606 = vpack.c.bf16 %v1598, %v1596
        %1607 = vmatprep.subr.bf16.mxu0 %v1604
        %1608 = vmatpush1.bf16.xpose.msra.mxu0 %v1603
        %1609 = vmatprep.subr.bf16.mxu0 %v1606
        %1610 = vmatpush1.bf16.xpose.msra.mxu0 %v1605
        %1611 = vmatprep.subr.bf16.mxu0 0
        %1612 = vmatpush1.bf16.xpose.msra.mxu0 0
        %1613 = vmatprep.subr.bf16.mxu0 0
        %1614 = vmatpush1.bf16.xpose.msra.mxu0 0
        %1615 = vmatprep.subr.bf16.mxu0 0
        %1616 = vmatpush1.bf16.xpose.msra.mxu0 0
        %1617 = vmatprep.subr.bf16.mxu0 0
        %1618 = vmatpush1.bf16.xpose.msra.mxu0 0
        %1619 = vmatprep.subr.bf16.mxu0 0
        %1620 = vmatpush1.bf16.xpose.msra.mxu0 0
        %1621 = vmatprep.subr.bf16.mxu0 0
        %1622 = vmatpush1.bf16.xpose.msra.mxu0 0
        %1623 = vmatprep.subr.bf16.mxu0 0
        %1624 = vmatpush1.bf16.xpose.msra.mxu0 0
        %1625 = vmatprep.subr.bf16.mxu0 0
        %1626 = vmatpush1.bf16.xpose.msra.mxu0 0
        %1627 = vmatprep.subr.bf16.mxu0 0
        %1628 = vmatpush1.bf16.xpose.msra.mxu0 0
        %1629 = vmatprep.subr.bf16.mxu0 0
        %1630 = vmatpush1.bf16.xpose.msra.mxu0 0
        %1631 = vmatprep.subr.bf16.mxu0 0
        %1632 = vmatpush1.bf16.xpose.msra.mxu0 0
        %1633 = vmatprep.subr.bf16.mxu0 0
        %1634 = vmatpush1.bf16.xpose.msra.mxu0 0
        %1635 = vmatprep.subr.bf16.mxu0 0
        %1636 = vmatpush1.bf16.xpose.msra.mxu0 0
        %1637 = vmatprep.subr.bf16.mxu0 0
        %1638 = vmatpush1.bf16.xpose.msra.mxu0 0
        %1639 = vmatprep.mubr.bf16.mxu0 %v1600
        %1640 = vmatmul.mubr.bf16.gmra.mrb[0].mxu0 %v1599
        %v1641 = vpop.f32.mrb[0].mxu0
        %v1642 = vadd.f32 0.0, %v1641
        %v1643 = vpop.f32.mrb[0].mxu0
        %v1644 = vpop.f32.mrb[0].mxu0
        %v1645 = vadd.f32 0.0, %v1644
        %v1646 = vpop.f32.mrb[0].mxu0
        %1647 = vmatprep.mubr.bf16.mxu0 %v1602
        %1648 = vmatmul.mubr.bf16.gmra.mrb[0].mxu0 %v1601
        %v1649 = vpop.f32.mrb[0].mxu0
        %v1650 = vadd.f32 0.0, %v1649
        %v1651 = vpop.f32.mrb[0].mxu0
        %v1652 = vpop.f32.mrb[0].mxu0
        %v1653 = vadd.f32 0.0, %v1652
        %v1654 = vpop.f32.mrb[0].mxu0
        %1655 = vdwg.mxu0
        %v1656 = vpack.c.bf16 %v1645, %v1642
        %v1657 = vpack.c.bf16 %v1653, %v1650
        %v1658 = vpack.c.bf16 %v1533, %v1531
        %v1659 = vpack.c.bf16 %v1534, %v1532
        %v1660 = vpack.c.bf16 %v1537, %v1535
        %v1661 = vpack.c.bf16 %v1538, %v1536
        %v1663 = vsel %vm335, %v1656, 0
        %v1666 = vsel %vm335, %v1657, 0
        %1668 = vmatprep.subr.bf16.mxu0 %v1659
        %1669 = vmatpush1.bf16.msra.mxu0 %v1658
        %1670 = vmatprep.subr.bf16.mxu0 %v1661
        %1671 = vmatpush1.bf16.msra.mxu0 %v1660
        %1672 = vmatprep.subr.bf16.mxu0 0
        %1673 = vmatpush1.bf16.msra.mxu0 0
        %1674 = vmatprep.subr.bf16.mxu0 0
        %1675 = vmatpush1.bf16.msra.mxu0 0
        %1676 = vmatprep.subr.bf16.mxu0 0
        %1677 = vmatpush1.bf16.msra.mxu0 0
        %1678 = vmatprep.subr.bf16.mxu0 0
        %1679 = vmatpush1.bf16.msra.mxu0 0
        %1680 = vmatprep.subr.bf16.mxu0 0
        %1681 = vmatpush1.bf16.msra.mxu0 0
        %1682 = vmatprep.subr.bf16.mxu0 0
        %1683 = vmatpush1.bf16.msra.mxu0 0
        %1684 = vmatprep.subr.bf16.mxu0 0
        %1685 = vmatpush1.bf16.msra.mxu0 0
        %1686 = vmatprep.subr.bf16.mxu0 0
        %1687 = vmatpush1.bf16.msra.mxu0 0
        %1688 = vmatprep.subr.bf16.mxu0 0
        %1689 = vmatpush1.bf16.msra.mxu0 0
        %1690 = vmatprep.subr.bf16.mxu0 0
        %1691 = vmatpush1.bf16.msra.mxu0 0
        %1692 = vmatprep.subr.bf16.mxu0 0
        %1693 = vmatpush1.bf16.msra.mxu0 0
        %1694 = vmatprep.subr.bf16.mxu0 0
        %1695 = vmatpush1.bf16.msra.mxu0 0
        %1696 = vmatprep.subr.bf16.mxu0 0
        %1697 = vmatpush1.bf16.msra.mxu0 0
        %1698 = vmatprep.subr.bf16.mxu0 0
        %1699 = vmatpush1.bf16.msra.mxu0 0
        %1700 = vmatprep.mubr.bf16.mxu0 0
        %1701 = vmatmul.mubr.bf16.gmra.mrb[0].mxu0 %v1663
        %v1702 = vpop.f32.mrb[0].mxu0
        %v1703 = vadd.f32 0.0, %v1702
        %v1704 = vpop.f32.mrb[0].mxu0
        %v1705 = vadd.f32 0.0, %v1704
        %v1706 = vpop.f32.mrb[0].mxu0
        %v1707 = vadd.f32 0.0, %v1706
        %v1708 = vpop.f32.mrb[0].mxu0
        %v1709 = vadd.f32 0.0, %v1708
        %1710 = vmatprep.mubr.bf16.mxu0 0
        %1711 = vmatmul.mubr.bf16.gmra.mrb[0].mxu0 %v1666
        %v1712 = vpop.f32.mrb[0].mxu0
        %v1713 = vadd.f32 0.0, %v1712
        %v1714 = vpop.f32.mrb[0].mxu0
        %v1715 = vadd.f32 0.0, %v1714
        %v1716 = vpop.f32.mrb[0].mxu0
        %v1717 = vadd.f32 0.0, %v1716
        %v1718 = vpop.f32.mrb[0].mxu0
        %v1719 = vadd.f32 0.0, %v1718
        %1720 = vdwg.mxu0
        %v1721 = vld [vmem:[%s2] sm:$0xff]
        %v1722 = vld [vmem:[%s2 + $0x8] sm:$0xff]
        %v1723 = vld [vmem:[%s2 + $0x10] sm:$0xff]
        %v1724 = vld [vmem:[%s2 + $0x18] sm:$0xff]
        %v1725 = vld [vmem:[%s3] sm:$0xff]
        %v1726 = vld [vmem:[%s3 + $0x8] sm:$0xff]
        %v1727 = vld [vmem:[%s3 + $0x10] sm:$0xff]
        %v1728 = vld [vmem:[%s3 + $0x18] sm:$0xff]
        %1730 = vset.pattern.permute.xlu0 0
        %1731 = vperm.xlu0 %1730, %v1725
        %v1732 = vpop.permute.xlu0 %1731
        %1735 = vset.pattern.permute.xlu0 0
        %1736 = vperm.xlu0 %1735, %v1726
        %v1737 = vpop.permute.xlu0 %1736
        %1740 = vset.pattern.permute.xlu0 0
        %1741 = vperm.xlu0 %1740, %v1727
        %v1742 = vpop.permute.xlu0 %1741
        %1745 = vset.pattern.permute.xlu0 0
        %1746 = vperm.xlu0 %1745, %v1728
        %v1747 = vpop.permute.xlu0 %1746
        %1749 = vmatprep.subr.mxu0 %v925
        %1750 = vmatpush1.msra.mxu0 %v923
        %1751 = vmatprep.subr.mxu0 %v929
        %1752 = vmatpush1.msra.mxu0 %v927
        %1753 = vmatprep.subr.mxu0 %v935
        %1754 = vmatpush1.msra.mxu0 %v933
        %1755 = vmatprep.subr.mxu0 %v939
        %1756 = vmatpush1.msra.mxu0 %v937
        %1757 = vmatprep.subr.mxu0 %v1185
        %1758 = vmatpush1.msra.mxu0 %v1183
        %1759 = vmatprep.subr.mxu0 %v1189
        %1760 = vmatpush1.msra.mxu0 %v1187
        %1761 = vmatprep.subr.mxu0 %v1195
        %1762 = vmatpush1.msra.mxu0 %v1193
        %1763 = vmatprep.subr.mxu0 %v1199
        %1764 = vmatpush1.msra.mxu0 %v1197
        %1765 = vmatprep.subr.mxu0 %v1445
        %1766 = vmatpush1.msra.mxu0 %v1443
        %1767 = vmatprep.subr.mxu0 %v1449
        %1768 = vmatpush1.msra.mxu0 %v1447
        %1769 = vmatprep.subr.mxu0 %v1455
        %1770 = vmatpush1.msra.mxu0 %v1453
        %1771 = vmatprep.subr.mxu0 %v1459
        %1772 = vmatpush1.msra.mxu0 %v1457
        %1773 = vmatprep.subr.mxu0 %v1705
        %1774 = vmatpush1.msra.mxu0 %v1703
        %1775 = vmatprep.subr.mxu0 %v1709
        %1776 = vmatpush1.msra.mxu0 %v1707
        %1777 = vmatprep.subr.mxu0 %v1715
        %1778 = vmatpush1.msra.mxu0 %v1713
        %1779 = vmatprep.subr.mxu0 %v1719
        %1780 = vmatpush1.msra.mxu0 %v1717
        %1781 = vmatprep.subr.mxu0 0.0
        %1782 = vmatpush1.msra.mxu0 0.0
        %1783 = vmatprep.subr.mxu0 0.0
        %1784 = vmatpush1.msra.mxu0 0.0
        %1785 = vmatprep.subr.mxu0 0.0
        %1786 = vmatpush1.msra.mxu0 0.0
        %1787 = vmatprep.subr.mxu0 0.0
        %1788 = vmatpush1.msra.mxu0 0.0
        %1789 = vmatprep.subr.mxu0 0.0
        %1790 = vmatpush1.msra.mxu0 0.0
        %1791 = vmatprep.subr.mxu0 0.0
        %1792 = vmatpush1.msra.mxu0 0.0
        %1793 = vmatprep.subr.mxu0 0.0
        %1794 = vmatpush1.msra.mxu0 0.0
        %1795 = vmatprep.subr.mxu0 0.0
        %1796 = vmatpush1.msra.mxu0 0.0
        %1797 = vmatprep.subr.mxu0 0.0
        %1798 = vmatpush1.msra.mxu0 0.0
        %1799 = vmatprep.subr.mxu0 0.0
        %1800 = vmatpush1.msra.mxu0 0.0
        %1801 = vmatprep.subr.mxu0 0.0
        %1802 = vmatpush1.msra.mxu0 0.0
        %1803 = vmatprep.subr.mxu0 0.0
        %1804 = vmatpush1.msra.mxu0 0.0
        %1805 = vmatprep.subr.mxu0 0.0
        %1806 = vmatpush1.msra.mxu0 0.0
        %1807 = vmatprep.subr.mxu0 0.0
        %1808 = vmatpush1.msra.mxu0 0.0
        %1809 = vmatprep.subr.mxu0 0.0
        %1810 = vmatpush1.msra.mxu0 0.0
        %1811 = vmatprep.subr.mxu0 0.0
        %1812 = vmatpush1.msra.mxu0 0.0
        %1813 = vmatprep.mubr.f32.mxu0 0.0
        %1814 = vmatmul.mubr.f32.gmra.mrb[0].mxu0 %v1721
        %v1815 = vpop.f32.mrb[0].mxu0
        %v1816 = vadd.f32 %v1732, %v1815
        %v1817 = vpop.f32.mrb[0].mxu0
        %v1818 = vadd.f32 %v1732, %v1817
        %1819 = vmatprep.mubr.f32.mxu0 0.0
        %1820 = vmatmul.mubr.f32.gmra.mrb[0].mxu0 %v1722
        %v1821 = vpop.f32.mrb[0].mxu0
        %v1822 = vadd.f32 %v1737, %v1821
        %v1823 = vpop.f32.mrb[0].mxu0
        %v1824 = vadd.f32 %v1737, %v1823
        %1825 = vmatprep.mubr.f32.mxu0 0.0
        %1826 = vmatmul.mubr.f32.gmra.mrb[0].mxu0 %v1723
        %v1827 = vpop.f32.mrb[0].mxu0
        %v1828 = vadd.f32 %v1742, %v1827
        %v1829 = vpop.f32.mrb[0].mxu0
        %v1830 = vadd.f32 %v1742, %v1829
        %1831 = vmatprep.mubr.f32.mxu0 0.0
        %1832 = vmatmul.mubr.f32.gmra.mrb[0].mxu0 %v1724
        %v1833 = vpop.f32.mrb[0].mxu0
        %v1834 = vadd.f32 %v1747, %v1833
        %v1835 = vpop.f32.mrb[0].mxu0
        %v1836 = vadd.f32 %v1747, %v1835
        %1837 = vdwg.mxu0
        %v1838 = vadd.f32 %v1816, %v1822
        %v1839 = vadd.f32 %v1838, %v1828
        %v1840 = vadd.f32 %v1839, %v1834
        %v1841 = vrot.slane %v1840, 4
        %v1842 = vadd.f32 %v1840, %v1841
        %v1843 = vrot.slane %v1842, 2
        %v1844 = vadd.f32 %v1842, %v1843
        %v1845 = vrot.slane %v1844, 1
        %v1846 = vadd.f32 %v1844, %v1845
        %v1847 = vadd.f32 %v1818, %v1824
        %v1848 = vadd.f32 %v1847, %v1830
        %v1849 = vadd.f32 %v1848, %v1836
        %v1850 = vrot.slane %v1849, 4
        %v1851 = vadd.f32 %v1849, %v1850
        %v1852 = vrot.slane %v1851, 2
        %v1853 = vadd.f32 %v1851, %v1852
        %v1854 = vrot.slane %v1853, 1
        %v1855 = vadd.f32 %v1853, %v1854
        %v1856 = vrcp.pop 32.0
        %v1857 = vmul.f32 %v1846, %v1856
        %v1858 = vmul.f32 %v1855, %v1856
        %v1859 = vsub.f32 %v1816, %v1857
        %v1860 = vsub.f32 %v1818, %v1858
        %v1861 = vsub.f32 %v1822, %v1857
        %v1862 = vsub.f32 %v1824, %v1858
        %v1863 = vsub.f32 %v1828, %v1857
        %v1864 = vsub.f32 %v1830, %v1858
        %v1865 = vsub.f32 %v1834, %v1857
        %v1866 = vsub.f32 %v1836, %v1858
        %v1867 = vmul.f32 %v1859, %v1859
        %v1868 = vmul.f32 %v1860, %v1860
        %v1869 = vmul.f32 %v1861, %v1861
        %v1870 = vmul.f32 %v1862, %v1862
        %v1871 = vmul.f32 %v1863, %v1863
        %v1872 = vmul.f32 %v1864, %v1864
        %v1873 = vmul.f32 %v1865, %v1865
        %v1874 = vmul.f32 %v1866, %v1866
        %v1875 = vadd.f32 %v1867, %v1869
        %v1876 = vadd.f32 %v1875, %v1871
        %v1877 = vadd.f32 %v1876, %v1873
        %v1878 = vrot.slane %v1877, 4
        %v1879 = vadd.f32 %v1877, %v1878
        %v1880 = vrot.slane %v1879, 2
        %v1881 = vadd.f32 %v1879, %v1880
        %v1882 = vrot.slane %v1881, 1
        %v1883 = vadd.f32 %v1881, %v1882
        %v1884 = vadd.f32 %v1868, %v1870
        %v1885 = vadd.f32 %v1884, %v1872
        %v1886 = vadd.f32 %v1885, %v1874
        %v1887 = vrot.slane %v1886, 4
        %v1888 = vadd.f32 %v1886, %v1887
        %v1889 = vrot.slane %v1888, 2
        %v1890 = vadd.f32 %v1888, %v1889
        %v1891 = vrot.slane %v1890, 1
        %v1892 = vadd.f32 %v1890, %v1891
        %v1893 = vmul.f32 %v1883, %v1856
        %v1894 = vmul.f32 %v1892, %v1856
        %v1895 = vadd.f32 %v1893, 1e-05
        %v1896 = vadd.f32 %v1894, 1e-05
        %v1897 = vrsqrt.pop %v1895
        %v1898 = vrsqrt.pop %v1896
        %v1899 = vmul.f32 %v1859, %v1897
        %v1900 = vmul.f32 %v1860, %v1898
        %v1901 = vmul.f32 %v1861, %v1897
        %v1902 = vmul.f32 %v1862, %v1898
        %v1903 = vmul.f32 %v1863, %v1897
        %v1904 = vmul.f32 %v1864, %v1898
        %v1905 = vmul.f32 %v1865, %v1897
        %v1906 = vmul.f32 %v1866, %v1898
        %v1907 = vld [vmem:[%s4] sm:$0xff]
        %v1908 = vld [vmem:[%s4 + $0x8] sm:$0xff]
        %v1909 = vld [vmem:[%s4 + $0x10] sm:$0xff]
        %v1910 = vld [vmem:[%s4 + $0x18] sm:$0xff]
        %1912 = vset.pattern.permute.xlu0 0
        %1913 = vperm.xlu0 %1912, %v1907
        %v1914 = vpop.permute.xlu0 %1913
        %1917 = vset.pattern.permute.xlu0 0
        %1918 = vperm.xlu0 %1917, %v1908
        %v1919 = vpop.permute.xlu0 %1918
        %1922 = vset.pattern.permute.xlu0 0
        %1923 = vperm.xlu0 %1922, %v1909
        %v1924 = vpop.permute.xlu0 %1923
        %1927 = vset.pattern.permute.xlu0 0
        %1928 = vperm.xlu0 %1927, %v1910
        %v1929 = vpop.permute.xlu0 %1928
        %v1931 = vmul.f32 %v1899, %v1914
        %v1932 = vmul.f32 %v1900, %v1914
        %v1933 = vmul.f32 %v1901, %v1919
        %v1934 = vmul.f32 %v1902, %v1919
        %v1935 = vmul.f32 %v1903, %v1924
        %v1936 = vmul.f32 %v1904, %v1924
        %v1937 = vmul.f32 %v1905, %v1929
        %v1938 = vmul.f32 %v1906, %v1929
        %v1939 = vld [vmem:[%s5] sm:$0xff]
        %v1940 = vld [vmem:[%s5 + $0x8] sm:$0xff]
        %v1941 = vld [vmem:[%s5 + $0x10] sm:$0xff]
        %v1942 = vld [vmem:[%s5 + $0x18] sm:$0xff]
        %1944 = vset.pattern.permute.xlu0 0
        %1945 = vperm.xlu0 %1944, %v1939
        %v1946 = vpop.permute.xlu0 %1945
        %1949 = vset.pattern.permute.xlu0 0
        %1950 = vperm.xlu0 %1949, %v1940
        %v1951 = vpop.permute.xlu0 %1950
        %1954 = vset.pattern.permute.xlu0 0
        %1955 = vperm.xlu0 %1954, %v1941
        %v1956 = vpop.permute.xlu0 %1955
        %1959 = vset.pattern.permute.xlu0 0
        %1960 = vperm.xlu0 %1959, %v1942
        %v1961 = vpop.permute.xlu0 %1960
        %v1963 = vadd.f32 %v1931, %v1946
        %v1964 = vadd.f32 %v1932, %v1946
        %v1965 = vadd.f32 %v1933, %v1951
        %v1966 = vadd.f32 %v1934, %v1951
        %v1967 = vadd.f32 %v1935, %v1956
        %v1968 = vadd.f32 %v1936, %v1956
        %v1969 = vadd.f32 %v1937, %v1961
        %v1970 = vadd.f32 %v1938, %v1961
        %1971 = vst [vmem:[%s244] sm:$0xff] %v1963
        %1972 = vst [vmem:[%s244 + $0x8] sm:$0xff] %v1964
        %1973 = vst [vmem:[%s244 + $0x10] sm:$0xff] %v1965
        %1974 = vst [vmem:[%s244 + $0x18] sm:$0xff] %v1966
        %1975 = vst [vmem:[%s244 + $0x20] sm:$0xff] %v1967
        %1976 = vst [vmem:[%s244 + $0x28] sm:$0xff] %v1968
        %1977 = vst [vmem:[%s244 + $0x30] sm:$0xff] %v1969
        %1978 = vst [vmem:[%s244 + $0x38] sm:$0xff] %v1970
        %s1979 = sand.u32 %s159, 1
        %s1980 = scalar_lea.sflag [#allocation3], %s1979
        %s1981 = sand.u32 %s159, 1
        %s1982 = smul.addr %s1981, 64
        %s1983 = scalar_lea.vmem [#allocation2], %s1982
        // Predicated region
        $region45: #{tpu_custom_call.1} parent=43 // pred_check
          %p1984 = pneg %p169
        $region46: #{tpu_custom_call.1} parent=43 // pred_check_branch
          %1986 = sbr.rel (%p1984) target = $region48
        $region47: #{tpu_custom_call.1} parent=43 // pred_region
          %s1988 = ssub.s32 1024, 1024
          %1989 = vsyncadd %s1980, %s1988
          %s1990 = smul.addr %s20, 8
          %s1991 = smul.addr %s1990, 128
          %s1992 = scalar_lea.hbm %s6, %s1991
          %s1993 = sshll.u32 %s1983, 4
          %s1994 = int_to_ptr.vmem [resolvable:$true] %s1993
          %1999 = dma.vmem_to_hbm [thread:$0]  %s1994, 1024, %s1992, %s1980, 256, 256, 16
        $region48: #{tpu_custom_call.1} parent=43 // pred_fallthru
          _
      $region44: #{tpu_custom_call.1} parent=5 // pred_fallthru
        _
      %p2000 = scmp.le.s32.totalorder 2, %s15
      // Predicated region
      $region49: #{tpu_custom_call.1} parent=5 // pred_check
        %p2001 = pneg %p2000
      $region50: #{tpu_custom_call.1} parent=5 // pred_check_branch
        %2003 = sbr.rel (%p2001) target = $region52
      $region51: #{tpu_custom_call.1} parent=5 // pred_region
        %s2004 = ssub.s32 %s15, 2
        // Predicated region
        $region53: #{tpu_custom_call.1} parent=51 // pred_check
          %p2005 = pneg %p175
        $region54: #{tpu_custom_call.1} parent=51 // pred_check_branch
          %2007 = sbr.rel (%p2005) target = $region56
        $region55: #{tpu_custom_call.1} parent=51 // pred_region
          %s2008 = sand.u32 %s160, 1
          %s2009 = scalar_lea.sflag [#allocation3], %s2008
          %s2010 = sand.u32 %s160, 1
          %s2011 = smul.addr %s2010, 64
          %s2012 = scalar_lea.vmem [#allocation2], %s2011
          %2013 = dma.done %s2009, 1024
        $region56: #{tpu_custom_call.1} parent=51 // pred_fallthru
          _
      $region52: #{tpu_custom_call.1} parent=5 // pred_fallthru
        _
    $region6: #{tpu_custom_call.1} parent=1 // loop_footer
      %s19 = sadd.s32 1, %s15
    $region7: #{tpu_custom_call.1} parent=1 // loop_footer_branch
      %14 = sbr.rel target = $region3
    $region8: #{tpu_custom_call.1} parent=1 // loop_exit
      _
    %2014 = vsyncpa [#allocation3], 1
    %s2015 = scalar_lea.sflag [#allocation3], 1
    %2016 = vsyncpa %s2015, 1

</llo_original>
